<compile_context>
chip_gen: v6e
topology: v6e:2x2x1
jax: 0.10.0
libtpu: 0.0.40
codegen_flags: <defaults>
</compile_context>

<pallas_src>
import jax
import jax.numpy as jnp
from jax.experimental import pallas as pl
from jax.experimental.pallas import tpu as pltpu

EPS = 1e-5


def _pad_to(x, m):
    return ((x + m - 1) // m) * m


# ----------------------------- Pallas kernel -------------------------------

def _make_residual_block_kernel(cp, offsets, length, m_interior):
    """Fused conv-bn-relu-conv-bn-add-relu kernel on the (CP, L) layout.

    cp:         sublane-padded channel count.
    offsets:    static lane offsets of the 9 conv taps in the flattened,
                spatially padded layout (dh*Wp + dw).
    length:     lane extent L (multiple of 128).
    m_interior: number of real (non-padding) pixels = N*H*W, for BN stats.
    """
    inv_m = 1.0 / float(m_interior)

    def lane_roll(a, off):
        # result[:, i] = a[:, (i + off) % length] -- a single XLU rotate.
        s = (-off) % length
        if s == 0:
            return a
        return pltpu.roll(a, s, axis=1)

    def kernel(x_ref, mask_ref, w1_ref, w2_ref, bn_ref, o_ref, s_ref):
        x = x_ref[...]            # (CP, L); also serves as the residual
        mask = mask_ref[...]      # (1, L); 1.0 at real pixels, 0.0 at padding
        bn = bn_ref[...]          # (CP, 4) = [g1 | beta1 | g2 | beta2]

        def conv3x3(a, w_ref):
            # Stage the 9 tap-shifted activations into the (9*CP, L) scratch,
            # then contract in ONE MXU matmul with K = 9*CP.
            for t, off in enumerate(offsets):
                s_ref[t * cp:(t + 1) * cp, :] = lane_roll(a, off)
            return jnp.dot(w_ref[...], s_ref[...],
                           preferred_element_type=jnp.float32)

        def batchnorm(y, g, beta):
            # Training-mode BN over the m_interior real pixels. Single masked
            # pass: the two reductions are independent so they can co-issue on
            # the XLUs; everything stays f32. Folded into one scale/shift FMA.
            # (Conv bias omitted upstream: it cancels exactly here.)
            ym = y * mask
            s1 = jnp.sum(ym, axis=1, keepdims=True)           # (CP, 1)
            s2 = jnp.sum(ym * y, axis=1, keepdims=True)       # (CP, 1)
            mean = s1 * inv_m
            var = s2 * inv_m - mean * mean
            scale = g * jax.lax.rsqrt(var + EPS)
            shift = beta - mean * scale
            return y * scale + shift

        h1 = jnp.maximum(
            batchnorm(conv3x3(x, w1_ref), bn[:, 0:1], bn[:, 1:2]), 0.0)
        h1 = h1 * mask            # re-zero padding so conv2's SAME pad is valid
        y2 = batchnorm(conv3x3(h1, w2_ref), bn[:, 2:3], bn[:, 3:4])
        o_ref[...] = jnp.maximum(y2 + x, 0.0)

    return kernel


# --------------------- channel-major (CP, L) core call ----------------------

def residual_block_cm(xcm, mask, w1s, w2s, bnp, *, n, h, w):
    """Runs the fused block directly on channel-major (CP, L) activations.

    Keep activations in this layout across consecutive residual blocks and
    convert NCHW <-> CM once at model entry/exit.
    """
    cp, l = xcm.shape
    wp = w + 2
    offsets = tuple(dh * wp + dw for dh in (-1, 0, 1) for dw in (-1, 0, 1))
    kernel = _make_residual_block_kernel(cp, offsets, l, n * h * w)
    vmem = lambda: pl.BlockSpec(memory_space=pltpu.MemorySpace.VMEM)

    # Single fused, gridless call: the whole (tiny) problem is VMEM-resident
    # and the intermediate activation never touches HBM.
    # NOTE: for production sizes, tile L with a grid (dimension_semantics
    # "parallel" so both v7x TensorCores are used), size tiles against 64 MiB
    # VMEM on v7x (128 MiB on v5e/v6e) with vmem_limit_bytes set explicitly,
    # switch BN to a two-pass / cross-block reduction, and on v6e/v7x cast the
    # matmul operands to bf16 (keep BN stats and the FMA in f32).
    return pl.pallas_call(
        kernel,
        out_shape=jax.ShapeDtypeStruct((cp, l), jnp.float32),
        in_specs=[vmem() for _ in range(5)],
        out_specs=vmem(),
        scratch_shapes=[pltpu.VMEM((9 * cp, l), jnp.float32)],
    )(xcm, mask, w1s, w2s, bnp)


# ------------------------------ JAX wrappers --------------------------------

def prepare_params(params, channels):
    """One-time weight/BN layout prep (do this OUTSIDE the jitted forward)."""
    c = channels
    cp = _pad_to(c, 8)

    def prep_w(wt):
        # PyTorch (C_out, C_in, 3, 3) -> stacked (CP, 9*CP); tap t = kh*3 + kw
        # occupies columns [t*CP, (t+1)*CP).
        taps = jnp.transpose(wt.astype(jnp.float32), (2, 3, 0, 1)).reshape(9, c, c)
        taps = jnp.pad(taps, ((0, 0), (0, cp - c), (0, cp - c)))
        return jnp.transpose(taps, (1, 0, 2)).reshape(cp, 9 * cp)

    def prep_bn(*vs):
        v = jnp.stack([u.astype(jnp.float32) for u in vs], axis=1)   # (C, 4)
        return jnp.pad(v, ((0, cp - c), (0, 0)))

    # Conv biases intentionally dropped: they cancel under training-mode BN.
    return {"w1s": prep_w(params["w1"]), "w2s": prep_w(params["w2"]),
            "bnp": prep_bn(params["g1"], params["bt1"],
                           params["g2"], params["bt2"])}


def residual_block_forward(x_nchw, prepped):
    """NCHW-in / NCHW-out wrapper (layout conversion lives here, demo only)."""
    n, c, h, w = x_nchw.shape
    hp, wp = h + 2, w + 2
    cp = prepped["bnp"].shape[0]
    l_data = n * hp * wp
    l = _pad_to(l_data, 128)

    x = x_nchw.astype(jnp.float32)
    # channel pad + spatial SAME pad, then channel-major flatten: (CP, L)
    xp = jnp.pad(x, ((0, 0), (0, cp - c), (1, 1), (1, 1)))   # (N, CP, Hp, Wp)
    xcm = jnp.transpose(xp, (1, 0, 2, 3)).reshape(cp, l_data)
    xcm = jnp.pad(xcm, ((0, 0), (0, l - l_data)))

    # interior mask: 1.0 at real pixels, 0.0 at spatial padding / lane tail.
    # (Pure function of static shapes -> constant-folded under jit.)
    mask = jnp.pad(jnp.ones((n, h, w), jnp.float32), ((0, 0), (1, 1), (1, 1)))
    mask = jnp.pad(mask.reshape(1, l_data), ((0, 0), (0, l - l_data)))

    out = residual_block_cm(xcm, mask, prepped["w1s"], prepped["w2s"],
                            prepped["bnp"], n=n, h=h, w=w)

    # extract interior pixels / real channels, back to NCHW
    out = out[:, :l_data].reshape(cp, n, hp, wp)[:c, :, 1:h + 1, 1:w + 1]
    return jnp.transpose(out, (1, 0, 2, 3))


# --------------------------- pure-JAX reference -----------------------------

def reference_forward(x_nchw, params):
    x = jnp.transpose(x_nchw, (0, 2, 3, 1)).astype(jnp.float32)

    def conv(t, w, b):
        wh = jnp.transpose(w, (2, 3, 1, 0))  # HWIO
        y = jax.lax.conv_general_dilated(
            t, wh, (1, 1), "SAME", dimension_numbers=("NHWC", "HWIO", "NHWC"))
        return y + b.reshape(1, 1, 1, -1)

    def bn(t, g, bt):
        mean = jnp.mean(t, axis=(0, 1, 2), keepdims=True)
        var = jnp.mean(jnp.square(t - mean), axis=(0, 1, 2), keepdims=True)
        return ((t - mean) * jax.lax.rsqrt(var + EPS)
                * g.reshape(1, 1, 1, -1) + bt.reshape(1, 1, 1, -1))

    h1 = jnp.maximum(bn(conv(x, params["w1"], params["b1"]),
                        params["g1"], params["bt1"]), 0.0)
    h2 = bn(conv(h1, params["w2"], params["b2"]),
            params["g2"], params["bt2"]) + x
    return jnp.transpose(jnp.maximum(h2, 0.0), (0, 3, 1, 2))


# ---------------------------------- main ------------------------------------

if __name__ == "__main__":
    N, C, H, W = 2, 4, 16, 16  # small shapes consistent with ResidualBlock(channels=4)

    key = jax.random.PRNGKey(0)
    keys = jax.random.split(key, 9)
    params = {
        "w1": 0.1 * jax.random.normal(keys[0], (C, C, 3, 3), jnp.float32),
        "b1": 0.1 * jax.random.normal(keys[1], (C,), jnp.float32),
        "g1": 1.0 + 0.1 * jax.random.normal(keys[2], (C,), jnp.float32),
        "bt1": 0.1 * jax.random.normal(keys[3], (C,), jnp.float32),
        "w2": 0.1 * jax.random.normal(keys[4], (C, C, 3, 3), jnp.float32),
        "b2": 0.1 * jax.random.normal(keys[5], (C,), jnp.float32),
        "g2": 1.0 + 0.1 * jax.random.normal(keys[6], (C,), jnp.float32),
        "bt2": 0.1 * jax.random.normal(keys[7], (C,), jnp.float32),
    }
    x = jax.random.normal(keys[8], (N, C, H, W), jnp.float32)

    # layout prep once, outside the jitted forward (amortised across calls)
    prepped = prepare_params(params, C)

    out = jax.jit(residual_block_forward)(x, prepped)
    out = jax.block_until_ready(out)

    ref = jax.block_until_ready(reference_forward(x, params))
    assert out.shape == (N, C, H, W)
    err = jnp.max(jnp.abs(out - ref))
    assert jnp.allclose(out, ref, rtol=1e-4, atol=1e-4), f"max abs err {err}"

    # TODO(synk): BatchNorm running_mean/running_var in-place buffer updates are
    # training bookkeeping (module state mutation), not part of the forward output.
    print("KERNEL_OK")
</pallas_src>

<mosaic_0001>
module attributes {stable_mosaic.version = 11 : i64} {
  func.func @kernel(%arg0: memref<8x768xf32, #tpu.memory_space<vmem>>, %arg1: memref<1x768xf32, #tpu.memory_space<vmem>>, %arg2: memref<8x72xf32, #tpu.memory_space<vmem>>, %arg3: memref<8x72xf32, #tpu.memory_space<vmem>>, %arg4: memref<8x4xf32, #tpu.memory_space<vmem>>, %arg5: memref<8x768xf32, #tpu.memory_space<vmem>>, %arg6: memref<72x768xf32, #tpu.memory_space<vmem>>) attributes {dimension_semantics = [], scalar_prefetch = 0 : i64, scratch_operands = 1 : i64, tpu.core_type = #tpu.core_type<tc>} {
    %c0 = arith.constant 0 : index
    %c0_0 = arith.constant 0 : index
    %0 = vector.load %arg0[%c0, %c0_0] : memref<8x768xf32, #tpu.memory_space<vmem>>, vector<8x768xf32>
    %c0_1 = arith.constant 0 : index
    %c0_2 = arith.constant 0 : index
    %1 = vector.load %arg1[%c0_1, %c0_2] : memref<1x768xf32, #tpu.memory_space<vmem>>, vector<1x768xf32>
    %c0_3 = arith.constant 0 : index
    %c0_4 = arith.constant 0 : index
    %2 = vector.load %arg4[%c0_3, %c0_4] : memref<8x4xf32, #tpu.memory_space<vmem>>, vector<8x4xf32>
    %c19_i32 = arith.constant 19 : i32
    %3 = tpu.dynamic_rotate %0 by %c19_i32 dim 1 : vector<8x768xf32>, i32 -> vector<8x768xf32>
    %c0_5 = arith.constant 0 : index
    %c0_6 = arith.constant 0 : index
    %4 = vector.load %arg6[%c0_5, %c0_6] : memref<72x768xf32, #tpu.memory_space<vmem>>, vector<8x768xf32>
    tpu.vector_store %arg6[%c0_5, %c0_6], %3 {strides = array<i32>} : memref<72x768xf32, #tpu.memory_space<vmem>>, vector<8x768xf32>,
    %c18_i32 = arith.constant 18 : i32
    %5 = tpu.dynamic_rotate %0 by %c18_i32 dim 1 : vector<8x768xf32>, i32 -> vector<8x768xf32>
    %c8 = arith.constant 8 : index
    %c0_7 = arith.constant 0 : index
    %6 = vector.load %arg6[%c8, %c0_7] : memref<72x768xf32, #tpu.memory_space<vmem>>, vector<8x768xf32>
    tpu.vector_store %arg6[%c8, %c0_7], %5 {strides = array<i32>} : memref<72x768xf32, #tpu.memory_space<vmem>>, vector<8x768xf32>,
    %c17_i32 = arith.constant 17 : i32
    %7 = tpu.dynamic_rotate %0 by %c17_i32 dim 1 : vector<8x768xf32>, i32 -> vector<8x768xf32>
    %c16 = arith.constant 16 : index
    %c0_8 = arith.constant 0 : index
    %8 = vector.load %arg6[%c16, %c0_8] : memref<72x768xf32, #tpu.memory_space<vmem>>, vector<8x768xf32>
    tpu.vector_store %arg6[%c16, %c0_8], %7 {strides = array<i32>} : memref<72x768xf32, #tpu.memory_space<vmem>>, vector<8x768xf32>,
    %c1_i32 = arith.constant 1 : i32
    %9 = tpu.dynamic_rotate %0 by %c1_i32 dim 1 : vector<8x768xf32>, i32 -> vector<8x768xf32>
    %c24 = arith.constant 24 : index
    %c0_9 = arith.constant 0 : index
    %10 = vector.load %arg6[%c24, %c0_9] : memref<72x768xf32, #tpu.memory_space<vmem>>, vector<8x768xf32>
    tpu.vector_store %arg6[%c24, %c0_9], %9 {strides = array<i32>} : memref<72x768xf32, #tpu.memory_space<vmem>>, vector<8x768xf32>,
    %c32 = arith.constant 32 : index
    %c0_10 = arith.constant 0 : index
    %11 = vector.load %arg6[%c32, %c0_10] : memref<72x768xf32, #tpu.memory_space<vmem>>, vector<8x768xf32>
    tpu.vector_store %arg6[%c32, %c0_10], %0 {strides = array<i32>} : memref<72x768xf32, #tpu.memory_space<vmem>>, vector<8x768xf32>,
    %c767_i32 = arith.constant 767 : i32
    %12 = tpu.dynamic_rotate %0 by %c767_i32 dim 1 : vector<8x768xf32>, i32 -> vector<8x768xf32>
    %c40 = arith.constant 40 : index
    %c0_11 = arith.constant 0 : index
    %13 = vector.load %arg6[%c40, %c0_11] : memref<72x768xf32, #tpu.memory_space<vmem>>, vector<8x768xf32>
    tpu.vector_store %arg6[%c40, %c0_11], %12 {strides = array<i32>} : memref<72x768xf32, #tpu.memory_space<vmem>>, vector<8x768xf32>,
    %c751_i32 = arith.constant 751 : i32
    %14 = tpu.dynamic_rotate %0 by %c751_i32 dim 1 : vector<8x768xf32>, i32 -> vector<8x768xf32>
    %c48 = arith.constant 48 : index
    %c0_12 = arith.constant 0 : index
    %15 = vector.load %arg6[%c48, %c0_12] : memref<72x768xf32, #tpu.memory_space<vmem>>, vector<8x768xf32>
    tpu.vector_store %arg6[%c48, %c0_12], %14 {strides = array<i32>} : memref<72x768xf32, #tpu.memory_space<vmem>>, vector<8x768xf32>,
    %c750_i32 = arith.constant 750 : i32
    %16 = tpu.dynamic_rotate %0 by %c750_i32 dim 1 : vector<8x768xf32>, i32 -> vector<8x768xf32>
    %c56 = arith.constant 56 : index
    %c0_13 = arith.constant 0 : index
    %17 = vector.load %arg6[%c56, %c0_13] : memref<72x768xf32, #tpu.memory_space<vmem>>, vector<8x768xf32>
    tpu.vector_store %arg6[%c56, %c0_13], %16 {strides = array<i32>} : memref<72x768xf32, #tpu.memory_space<vmem>>, vector<8x768xf32>,
    %c749_i32 = arith.constant 749 : i32
    %18 = tpu.dynamic_rotate %0 by %c749_i32 dim 1 : vector<8x768xf32>, i32 -> vector<8x768xf32>
    %c64 = arith.constant 64 : index
    %c0_14 = arith.constant 0 : index
    %19 = vector.load %arg6[%c64, %c0_14] : memref<72x768xf32, #tpu.memory_space<vmem>>, vector<8x768xf32>
    tpu.vector_store %arg6[%c64, %c0_14], %18 {strides = array<i32>} : memref<72x768xf32, #tpu.memory_space<vmem>>, vector<8x768xf32>,
    %c0_15 = arith.constant 0 : index
    %c0_16 = arith.constant 0 : index
    %20 = vector.load %arg2[%c0_15, %c0_16] : memref<8x72xf32, #tpu.memory_space<vmem>>, vector<8x72xf32>
    %c0_17 = arith.constant 0 : index
    %c0_18 = arith.constant 0 : index
    %21 = vector.load %arg6[%c0_17, %c0_18] : memref<72x768xf32, #tpu.memory_space<vmem>>, vector<72x768xf32>
    %cst = arith.constant dense<0.000000e+00> : vector<8x768xf32>
    %22 = tpu.matmul %20, %21, %cst {dimension_numbers = #tpu.dot_dimension_numbers<[1], [0], [0], [1], [0, 0, 1, 1], [], []>} : vector<8x72xf32>, vector<72x768xf32>, vector<8x768xf32> -> vector<8x768xf32>
    %23 = vector.extract_strided_slice %2 {offsets = [0, 0], sizes = [8, 1], strides = [1, 1]} : vector<8x4xf32> to vector<8x1xf32>
    %24 = vector.extract_strided_slice %2 {offsets = [0, 1], sizes = [8, 1], strides = [1, 1]} : vector<8x4xf32> to vector<8x1xf32>
    %25 = vector.broadcast %1 : vector<1x768xf32> to vector<8x768xf32>
    %26 = arith.mulf %22, %25 : vector<8x768xf32>
    %cst_19 = arith.constant dense<0.000000e+00> : vector<8xf32>
    %27 = vector.multi_reduction <add>, %26, %cst_19 [1] : vector<8x768xf32> to vector<8xf32>
    %28 = vector.shape_cast %27 : vector<8xf32> to vector<8x1xf32>
    %29 = arith.mulf %26, %22 : vector<8x768xf32>
    %cst_20 = arith.constant dense<0.000000e+00> : vector<8xf32>
    %30 = vector.multi_reduction <add>, %29, %cst_20 [1] : vector<8x768xf32> to vector<8xf32>
    %31 = vector.shape_cast %30 : vector<8xf32> to vector<8x1xf32>
    %cst_21 = arith.constant 0.001953125 : f32
    %32 = vector.broadcast %cst_21 : f32 to vector<8x1xf32>
    %33 = arith.mulf %28, %32 : vector<8x1xf32>
    %cst_22 = arith.constant 0.001953125 : f32
    %34 = vector.broadcast %cst_22 : f32 to vector<8x1xf32>
    %35 = arith.mulf %31, %34 : vector<8x1xf32>
    %36 = arith.mulf %33, %33 : vector<8x1xf32>
    %37 = arith.subf %35, %36 : vector<8x1xf32>
    %cst_23 = arith.constant 9.99999974E-6 : f32
    %38 = vector.broadcast %cst_23 : f32 to vector<8x1xf32>
    %39 = arith.addf %37, %38 : vector<8x1xf32>
    %40 = math.rsqrt %39 : vector<8x1xf32>
    %41 = arith.mulf %23, %40 : vector<8x1xf32>
    %42 = arith.mulf %33, %41 : vector<8x1xf32>
    %43 = arith.subf %24, %42 : vector<8x1xf32>
    %44 = vector.broadcast %41 : vector<8x1xf32> to vector<8x768xf32>
    %45 = arith.mulf %22, %44 : vector<8x768xf32>
    %46 = vector.broadcast %43 : vector<8x1xf32> to vector<8x768xf32>
    %47 = arith.addf %45, %46 : vector<8x768xf32>
    %cst_24 = arith.constant 0.000000e+00 : f32
    %48 = vector.broadcast %cst_24 : f32 to vector<8x768xf32>
    %49 = arith.maximumf %47, %48 : vector<8x768xf32>
    %50 = vector.broadcast %1 : vector<1x768xf32> to vector<8x768xf32>
    %51 = arith.mulf %49, %50 : vector<8x768xf32>
    %c19_i32_25 = arith.constant 19 : i32
    %52 = tpu.dynamic_rotate %51 by %c19_i32_25 dim 1 : vector<8x768xf32>, i32 -> vector<8x768xf32>
    %c0_26 = arith.constant 0 : index
    %c0_27 = arith.constant 0 : index
    %53 = vector.load %arg6[%c0_26, %c0_27] : memref<72x768xf32, #tpu.memory_space<vmem>>, vector<8x768xf32>
    tpu.vector_store %arg6[%c0_26, %c0_27], %52 {strides = array<i32>} : memref<72x768xf32, #tpu.memory_space<vmem>>, vector<8x768xf32>,
    %c18_i32_28 = arith.constant 18 : i32
    %54 = tpu.dynamic_rotate %51 by %c18_i32_28 dim 1 : vector<8x768xf32>, i32 -> vector<8x768xf32>
    %c8_29 = arith.constant 8 : index
    %c0_30 = arith.constant 0 : index
    %55 = vector.load %arg6[%c8_29, %c0_30] : memref<72x768xf32, #tpu.memory_space<vmem>>, vector<8x768xf32>
    tpu.vector_store %arg6[%c8_29, %c0_30], %54 {strides = array<i32>} : memref<72x768xf32, #tpu.memory_space<vmem>>, vector<8x768xf32>,
    %c17_i32_31 = arith.constant 17 : i32
    %56 = tpu.dynamic_rotate %51 by %c17_i32_31 dim 1 : vector<8x768xf32>, i32 -> vector<8x768xf32>
    %c16_32 = arith.constant 16 : index
    %c0_33 = arith.constant 0 : index
    %57 = vector.load %arg6[%c16_32, %c0_33] : memref<72x768xf32, #tpu.memory_space<vmem>>, vector<8x768xf32>
    tpu.vector_store %arg6[%c16_32, %c0_33], %56 {strides = array<i32>} : memref<72x768xf32, #tpu.memory_space<vmem>>, vector<8x768xf32>,
    %c1_i32_34 = arith.constant 1 : i32
    %58 = tpu.dynamic_rotate %51 by %c1_i32_34 dim 1 : vector<8x768xf32>, i32 -> vector<8x768xf32>
    %c24_35 = arith.constant 24 : index
    %c0_36 = arith.constant 0 : index
    %59 = vector.load %arg6[%c24_35, %c0_36] : memref<72x768xf32, #tpu.memory_space<vmem>>, vector<8x768xf32>
    tpu.vector_store %arg6[%c24_35, %c0_36], %58 {strides = array<i32>} : memref<72x768xf32, #tpu.memory_space<vmem>>, vector<8x768xf32>,
    %c32_37 = arith.constant 32 : index
    %c0_38 = arith.constant 0 : index
    %60 = vector.load %arg6[%c32_37, %c0_38] : memref<72x768xf32, #tpu.memory_space<vmem>>, vector<8x768xf32>
    tpu.vector_store %arg6[%c32_37, %c0_38], %51 {strides = array<i32>} : memref<72x768xf32, #tpu.memory_space<vmem>>, vector<8x768xf32>,
    %c767_i32_39 = arith.constant 767 : i32
    %61 = tpu.dynamic_rotate %51 by %c767_i32_39 dim 1 : vector<8x768xf32>, i32 -> vector<8x768xf32>
    %c40_40 = arith.constant 40 : index
    %c0_41 = arith.constant 0 : index
    %62 = vector.load %arg6[%c40_40, %c0_41] : memref<72x768xf32, #tpu.memory_space<vmem>>, vector<8x768xf32>
    tpu.vector_store %arg6[%c40_40, %c0_41], %61 {strides = array<i32>} : memref<72x768xf32, #tpu.memory_space<vmem>>, vector<8x768xf32>,
    %c751_i32_42 = arith.constant 751 : i32
    %63 = tpu.dynamic_rotate %51 by %c751_i32_42 dim 1 : vector<8x768xf32>, i32 -> vector<8x768xf32>
    %c48_43 = arith.constant 48 : index
    %c0_44 = arith.constant 0 : index
    %64 = vector.load %arg6[%c48_43, %c0_44] : memref<72x768xf32, #tpu.memory_space<vmem>>, vector<8x768xf32>
    tpu.vector_store %arg6[%c48_43, %c0_44], %63 {strides = array<i32>} : memref<72x768xf32, #tpu.memory_space<vmem>>, vector<8x768xf32>,
    %c750_i32_45 = arith.constant 750 : i32
    %65 = tpu.dynamic_rotate %51 by %c750_i32_45 dim 1 : vector<8x768xf32>, i32 -> vector<8x768xf32>
    %c56_46 = arith.constant 56 : index
    %c0_47 = arith.constant 0 : index
    %66 = vector.load %arg6[%c56_46, %c0_47] : memref<72x768xf32, #tpu.memory_space<vmem>>, vector<8x768xf32>
    tpu.vector_store %arg6[%c56_46, %c0_47], %65 {strides = array<i32>} : memref<72x768xf32, #tpu.memory_space<vmem>>, vector<8x768xf32>,
    %c749_i32_48 = arith.constant 749 : i32
    %67 = tpu.dynamic_rotate %51 by %c749_i32_48 dim 1 : vector<8x768xf32>, i32 -> vector<8x768xf32>
    %c64_49 = arith.constant 64 : index
    %c0_50 = arith.constant 0 : index
    %68 = vector.load %arg6[%c64_49, %c0_50] : memref<72x768xf32, #tpu.memory_space<vmem>>, vector<8x768xf32>
    tpu.vector_store %arg6[%c64_49, %c0_50], %67 {strides = array<i32>} : memref<72x768xf32, #tpu.memory_space<vmem>>, vector<8x768xf32>,
    %c0_51 = arith.constant 0 : index
    %c0_52 = arith.constant 0 : index
    %69 = vector.load %arg3[%c0_51, %c0_52] : memref<8x72xf32, #tpu.memory_space<vmem>>, vector<8x72xf32>
    %c0_53 = arith.constant 0 : index
    %c0_54 = arith.constant 0 : index
    %70 = vector.load %arg6[%c0_53, %c0_54] : memref<72x768xf32, #tpu.memory_space<vmem>>, vector<72x768xf32>
    %cst_55 = arith.constant dense<0.000000e+00> : vector<8x768xf32>
    %71 = tpu.matmul %69, %70, %cst_55 {dimension_numbers = #tpu.dot_dimension_numbers<[1], [0], [0], [1], [0, 0, 1, 1], [], []>} : vector<8x72xf32>, vector<72x768xf32>, vector<8x768xf32> -> vector<8x768xf32>
    %72 = vector.extract_strided_slice %2 {offsets = [0, 2], sizes = [8, 1], strides = [1, 1]} : vector<8x4xf32> to vector<8x1xf32>
    %73 = vector.extract_strided_slice %2 {offsets = [0, 3], sizes = [8, 1], strides = [1, 1]} : vector<8x4xf32> to vector<8x1xf32>
    %74 = vector.broadcast %1 : vector<1x768xf32> to vector<8x768xf32>
    %75 = arith.mulf %71, %74 : vector<8x768xf32>
    %cst_56 = arith.constant dense<0.000000e+00> : vector<8xf32>
    %76 = vector.multi_reduction <add>, %75, %cst_56 [1] : vector<8x768xf32> to vector<8xf32>
    %77 = vector.shape_cast %76 : vector<8xf32> to vector<8x1xf32>
    %78 = arith.mulf %75, %71 : vector<8x768xf32>
    %cst_57 = arith.constant dense<0.000000e+00> : vector<8xf32>
    %79 = vector.multi_reduction <add>, %78, %cst_57 [1] : vector<8x768xf32> to vector<8xf32>
    %80 = vector.shape_cast %79 : vector<8xf32> to vector<8x1xf32>
    %cst_58 = arith.constant 0.001953125 : f32
    %81 = vector.broadcast %cst_58 : f32 to vector<8x1xf32>
    %82 = arith.mulf %77, %81 : vector<8x1xf32>
    %cst_59 = arith.constant 0.001953125 : f32
    %83 = vector.broadcast %cst_59 : f32 to vector<8x1xf32>
    %84 = arith.mulf %80, %83 : vector<8x1xf32>
    %85 = arith.mulf %82, %82 : vector<8x1xf32>
    %86 = arith.subf %84, %85 : vector<8x1xf32>
    %cst_60 = arith.constant 9.99999974E-6 : f32
    %87 = vector.broadcast %cst_60 : f32 to vector<8x1xf32>
    %88 = arith.addf %86, %87 : vector<8x1xf32>
    %89 = math.rsqrt %88 : vector<8x1xf32>
    %90 = arith.mulf %72, %89 : vector<8x1xf32>
    %91 = arith.mulf %82, %90 : vector<8x1xf32>
    %92 = arith.subf %73, %91 : vector<8x1xf32>
    %93 = vector.broadcast %90 : vector<8x1xf32> to vector<8x768xf32>
    %94 = arith.mulf %71, %93 : vector<8x768xf32>
    %95 = vector.broadcast %92 : vector<8x1xf32> to vector<8x768xf32>
    %96 = arith.addf %94, %95 : vector<8x768xf32>
    %97 = arith.addf %96, %0 : vector<8x768xf32>
    %cst_61 = arith.constant 0.000000e+00 : f32
    %98 = vector.broadcast %cst_61 : f32 to vector<8x768xf32>
    %99 = arith.maximumf %97, %98 : vector<8x768xf32>
    %c0_62 = arith.constant 0 : index
    %c0_63 = arith.constant 0 : index
    %100 = vector.load %arg5[%c0_62, %c0_63] : memref<8x768xf32, #tpu.memory_space<vmem>>, vector<8x768xf32>
    tpu.vector_store %arg5[%c0_62, %c0_63], %99 {strides = array<i32>} : memref<8x768xf32, #tpu.memory_space<vmem>>, vector<8x768xf32>,
    return
  }
}

</mosaic_0001>

<llo_original>
// kernel: residual_block_forward.1
$region0: #{residual_block_forward.1}
  #allocation0 [shape = 'u32[]', space=smem, size = 0x4, offset = 0x4, fixed_abs, tag = 'smem constant byte address 0x4 - core index']
  #allocation1 [shape = 'u32[144,128]{1,0:T(1,128)}', space=vmem, size = 0x12000, scoped, tag = 'internal scratch']
  #allocation2 [shape = 'f32[72,768]{1,0:T(8,128)}', space=vmem, size = 0x36000, scoped, tag = 'scratch operand']
  %s0 = inlined_call_operand.vmem [shape: f32[8,768], index: 0, kind: input, shape index: {}]
  %s1 = inlined_call_operand.vmem [shape: f32[1,768], index: 1, kind: input, shape index: {}]
  %s2 = inlined_call_operand.vmem [shape: f32[8,72], index: 2, kind: input, shape index: {}]
  %s3 = inlined_call_operand.vmem [shape: f32[8,72], index: 3, kind: input, shape index: {}]
  %s4 = inlined_call_operand.vmem [shape: f32[8,4], index: 4, kind: input, shape index: {}]
  %s5 = inlined_call_operand.vmem [shape: f32[8,768], index: 5, kind: output, shape index: {}]
  %s6 = sld [smem:[#allocation0]]
  $region30: #{residual_block_forward.1} parent=0
    _
  %s8 = ssub.s32 1, %s6
  %s9 = scalar_select 0, %s8, %s6
  // Predicated region
  $region2: #{residual_block_forward.1} parent=0 // pred_check
    _
  $region3: #{residual_block_forward.1} parent=0 // pred_check_branch
    %11 = sbr.rel (0) target = $region5
  $region4: #{residual_block_forward.1} parent=0 // pred_region
    _
  $region5: #{residual_block_forward.1} parent=0 // pred_fallthru
    _
  // Predicated region
  $region6: #{residual_block_forward.1} parent=0 // pred_check
    _
  $region7: #{residual_block_forward.1} parent=0 // pred_check_branch
    %13 = sbr.rel (0) target = $region9
  $region8: #{residual_block_forward.1} parent=0 // pred_region
    _
  $region9: #{residual_block_forward.1} parent=0 // pred_fallthru
    _
  // Predicated region
  $region10: #{residual_block_forward.1} parent=0 // pred_check
    _
  $region11: #{residual_block_forward.1} parent=0 // pred_check_branch
    %15 = sbr.rel (0) target = $region13
  $region12: #{residual_block_forward.1} parent=0 // pred_region
    _
  $region13: #{residual_block_forward.1} parent=0 // pred_fallthru
    _
  // Predicated region
  $region14: #{residual_block_forward.1} parent=0 // pred_check
    _
  $region15: #{residual_block_forward.1} parent=0 // pred_check_branch
    %17 = sbr.rel (0) target = $region17
  $region16: #{residual_block_forward.1} parent=0 // pred_region
    _
  $region17: #{residual_block_forward.1} parent=0 // pred_fallthru
    _
  // Predicated region
  $region18: #{residual_block_forward.1} parent=0 // pred_check
    _
  $region19: #{residual_block_forward.1} parent=0 // pred_check_branch
    %19 = sbr.rel (0) target = $region21
  $region20: #{residual_block_forward.1} parent=0 // pred_region
    _
  $region21: #{residual_block_forward.1} parent=0 // pred_fallthru
    _
  %v20 = vld [vmem:[%s0] sm:$0xff]
  %v21 = vld [vmem:[%s0 + $0x8] sm:$0xff]
  %v22 = vld [vmem:[%s0 + $0x10] sm:$0xff]
  %v23 = vld [vmem:[%s0 + $0x18] sm:$0xff]
  %v24 = vld [vmem:[%s0 + $0x20] sm:$0xff]
  %v25 = vld [vmem:[%s0 + $0x28] sm:$0xff]
  %v26 = vld [vmem:[%s1] sm:$0x3f]
  %v27 = vld [vmem:[%s4] sm:$0xff]
  %28 = vrot.lane.b32.xlu0 %v20, 19
  %v29 = vpop.permute.xlu0 %28
  %30 = vrot.lane.b32.xlu0 %v21, 19
  %v31 = vpop.permute.xlu0 %30
  %32 = vrot.lane.b32.xlu0 %v22, 19
  %v33 = vpop.permute.xlu0 %32
  %34 = vrot.lane.b32.xlu0 %v23, 19
  %v35 = vpop.permute.xlu0 %34
  %36 = vrot.lane.b32.xlu0 %v24, 19
  %v37 = vpop.permute.xlu0 %36
  %38 = vrot.lane.b32.xlu0 %v25, 19
  %v39 = vpop.permute.xlu0 %38
  %v40 = vlaneseq
  %v41 = vand.u32 %v40, 127
  %vm42 = vcmp.lt.s32.totalorder %v41, 19
  %v43 = vsel %vm42, %v37, %v39
  %v44 = vsel %vm42, %v35, %v37
  %v45 = vsel %vm42, %v33, %v35
  %v46 = vsel %vm42, %v31, %v33
  %v47 = vsel %vm42, %v29, %v31
  %v48 = vsel %vm42, %v39, %v29
  %49 = vst [vmem:[#allocation2] sm:$0xff] %v48
  %50 = vst [vmem:[#allocation2 + $0x8] sm:$0xff] %v47
  %51 = vst [vmem:[#allocation2 + $0x10] sm:$0xff] %v46
  %52 = vst [vmem:[#allocation2 + $0x18] sm:$0xff] %v45
  %53 = vst [vmem:[#allocation2 + $0x20] sm:$0xff] %v44
  %54 = vst [vmem:[#allocation2 + $0x28] sm:$0xff] %v43
  %55 = vrot.lane.b32.xlu0 %v20, 18
  %v56 = vpop.permute.xlu0 %55
  %57 = vrot.lane.b32.xlu0 %v21, 18
  %v58 = vpop.permute.xlu0 %57
  %59 = vrot.lane.b32.xlu0 %v22, 18
  %v60 = vpop.permute.xlu0 %59
  %61 = vrot.lane.b32.xlu0 %v23, 18
  %v62 = vpop.permute.xlu0 %61
  %63 = vrot.lane.b32.xlu0 %v24, 18
  %v64 = vpop.permute.xlu0 %63
  %65 = vrot.lane.b32.xlu0 %v25, 18
  %v66 = vpop.permute.xlu0 %65
  %vm67 = vcmp.lt.s32.totalorder %v41, 18
  %v68 = vsel %vm67, %v64, %v66
  %v69 = vsel %vm67, %v62, %v64
  %v70 = vsel %vm67, %v60, %v62
  %v71 = vsel %vm67, %v58, %v60
  %v72 = vsel %vm67, %v56, %v58
  %v73 = vsel %vm67, %v66, %v56
  %74 = vst [vmem:[#allocation2 + $0x30] sm:$0xff] %v73
  %75 = vst [vmem:[#allocation2 + $0x38] sm:$0xff] %v72
  %76 = vst [vmem:[#allocation2 + $0x40] sm:$0xff] %v71
  %77 = vst [vmem:[#allocation2 + $0x48] sm:$0xff] %v70
  %78 = vst [vmem:[#allocation2 + $0x50] sm:$0xff] %v69
  %79 = vst [vmem:[#allocation2 + $0x58] sm:$0xff] %v68
  %80 = vrot.lane.b32.xlu0 %v20, 17
  %v81 = vpop.permute.xlu0 %80
  %82 = vrot.lane.b32.xlu0 %v21, 17
  %v83 = vpop.permute.xlu0 %82
  %84 = vrot.lane.b32.xlu0 %v22, 17
  %v85 = vpop.permute.xlu0 %84
  %86 = vrot.lane.b32.xlu0 %v23, 17
  %v87 = vpop.permute.xlu0 %86
  %88 = vrot.lane.b32.xlu0 %v24, 17
  %v89 = vpop.permute.xlu0 %88
  %90 = vrot.lane.b32.xlu0 %v25, 17
  %v91 = vpop.permute.xlu0 %90
  %vm92 = vcmp.lt.s32.totalorder %v41, 17
  %v93 = vsel %vm92, %v89, %v91
  %v94 = vsel %vm92, %v87, %v89
  %v95 = vsel %vm92, %v85, %v87
  %v96 = vsel %vm92, %v83, %v85
  %v97 = vsel %vm92, %v81, %v83
  %v98 = vsel %vm92, %v91, %v81
  %99 = vst [vmem:[#allocation2 + $0x60] sm:$0xff] %v98
  %100 = vst [vmem:[#allocation2 + $0x68] sm:$0xff] %v97
  %101 = vst [vmem:[#allocation2 + $0x70] sm:$0xff] %v96
  %102 = vst [vmem:[#allocation2 + $0x78] sm:$0xff] %v95
  %103 = vst [vmem:[#allocation2 + $0x80] sm:$0xff] %v94
  %104 = vst [vmem:[#allocation2 + $0x88] sm:$0xff] %v93
  %105 = vrot.lane.b32.xlu0 %v20, 1
  %v106 = vpop.permute.xlu0 %105
  %107 = vrot.lane.b32.xlu0 %v21, 1
  %v108 = vpop.permute.xlu0 %107
  %109 = vrot.lane.b32.xlu0 %v22, 1
  %v110 = vpop.permute.xlu0 %109
  %111 = vrot.lane.b32.xlu0 %v23, 1
  %v112 = vpop.permute.xlu0 %111
  %113 = vrot.lane.b32.xlu0 %v24, 1
  %v114 = vpop.permute.xlu0 %113
  %115 = vrot.lane.b32.xlu0 %v25, 1
  %v116 = vpop.permute.xlu0 %115
  %vm117 = vcmp.lt.s32.totalorder %v41, 1
  %v118 = vsel %vm117, %v114, %v116
  %v119 = vsel %vm117, %v112, %v114
  %v120 = vsel %vm117, %v110, %v112
  %v121 = vsel %vm117, %v108, %v110
  %v122 = vsel %vm117, %v106, %v108
  %v123 = vsel %vm117, %v116, %v106
  %124 = vst [vmem:[#allocation2 + $0x90] sm:$0xff] %v123
  %125 = vst [vmem:[#allocation2 + $0x98] sm:$0xff] %v122
  %126 = vst [vmem:[#allocation2 + $0xa0] sm:$0xff] %v121
  %127 = vst [vmem:[#allocation2 + $0xa8] sm:$0xff] %v120
  %128 = vst [vmem:[#allocation2 + $0xb0] sm:$0xff] %v119
  %129 = vst [vmem:[#allocation2 + $0xb8] sm:$0xff] %v118
  %130 = vst [vmem:[#allocation2 + $0xc0] sm:$0xff] %v20
  %131 = vst [vmem:[#allocation2 + $0xc8] sm:$0xff] %v21
  %132 = vst [vmem:[#allocation2 + $0xd0] sm:$0xff] %v22
  %133 = vst [vmem:[#allocation2 + $0xd8] sm:$0xff] %v23
  %134 = vst [vmem:[#allocation2 + $0xe0] sm:$0xff] %v24
  %135 = vst [vmem:[#allocation2 + $0xe8] sm:$0xff] %v25
  %136 = vrot.lane.b32.xlu0 %v20, 127
  %v137 = vpop.permute.xlu0 %136
  %138 = vrot.lane.b32.xlu0 %v21, 127
  %v139 = vpop.permute.xlu0 %138
  %140 = vrot.lane.b32.xlu0 %v22, 127
  %v141 = vpop.permute.xlu0 %140
  %142 = vrot.lane.b32.xlu0 %v23, 127
  %v143 = vpop.permute.xlu0 %142
  %144 = vrot.lane.b32.xlu0 %v24, 127
  %v145 = vpop.permute.xlu0 %144
  %146 = vrot.lane.b32.xlu0 %v25, 127
  %v147 = vpop.permute.xlu0 %146
  %vm148 = vcmp.lt.s32.totalorder %v41, 127
  %v149 = vsel %vm148, %v145, %v147
  %v150 = vsel %vm148, %v143, %v145
  %v151 = vsel %vm148, %v141, %v143
  %v152 = vsel %vm148, %v139, %v141
  %v153 = vsel %vm148, %v137, %v139
  %v154 = vsel %vm148, %v147, %v137
  %155 = vst [vmem:[#allocation2 + $0xf0] sm:$0xff] %v153
  %156 = vst [vmem:[#allocation2 + $0xf8] sm:$0xff] %v152
  %157 = vst [vmem:[#allocation2 + $0x100] sm:$0xff] %v151
  %158 = vst [vmem:[#allocation2 + $0x108] sm:$0xff] %v150
  %159 = vst [vmem:[#allocation2 + $0x110] sm:$0xff] %v149
  %160 = vst [vmem:[#allocation2 + $0x118] sm:$0xff] %v154
  %161 = vrot.lane.b32.xlu0 %v20, 111
  %v162 = vpop.permute.xlu0 %161
  %163 = vrot.lane.b32.xlu0 %v21, 111
  %v164 = vpop.permute.xlu0 %163
  %165 = vrot.lane.b32.xlu0 %v22, 111
  %v166 = vpop.permute.xlu0 %165
  %167 = vrot.lane.b32.xlu0 %v23, 111
  %v168 = vpop.permute.xlu0 %167
  %169 = vrot.lane.b32.xlu0 %v24, 111
  %v170 = vpop.permute.xlu0 %169
  %171 = vrot.lane.b32.xlu0 %v25, 111
  %v172 = vpop.permute.xlu0 %171
  %vm173 = vcmp.lt.s32.totalorder %v41, 111
  %v174 = vsel %vm173, %v170, %v172
  %v175 = vsel %vm173, %v168, %v170
  %v176 = vsel %vm173, %v166, %v168
  %v177 = vsel %vm173, %v164, %v166
  %v178 = vsel %vm173, %v162, %v164
  %v179 = vsel %vm173, %v172, %v162
  %180 = vst [vmem:[#allocation2 + $0x120] sm:$0xff] %v178
  %181 = vst [vmem:[#allocation2 + $0x128] sm:$0xff] %v177
  %182 = vst [vmem:[#allocation2 + $0x130] sm:$0xff] %v176
  %183 = vst [vmem:[#allocation2 + $0x138] sm:$0xff] %v175
  %184 = vst [vmem:[#allocation2 + $0x140] sm:$0xff] %v174
  %185 = vst [vmem:[#allocation2 + $0x148] sm:$0xff] %v179
  %186 = vrot.lane.b32.xlu0 %v20, 110
  %v187 = vpop.permute.xlu0 %186
  %188 = vrot.lane.b32.xlu0 %v21, 110
  %v189 = vpop.permute.xlu0 %188
  %190 = vrot.lane.b32.xlu0 %v22, 110
  %v191 = vpop.permute.xlu0 %190
  %192 = vrot.lane.b32.xlu0 %v23, 110
  %v193 = vpop.permute.xlu0 %192
  %194 = vrot.lane.b32.xlu0 %v24, 110
  %v195 = vpop.permute.xlu0 %194
  %196 = vrot.lane.b32.xlu0 %v25, 110
  %v197 = vpop.permute.xlu0 %196
  %vm198 = vcmp.lt.s32.totalorder %v41, 110
  %v199 = vsel %vm198, %v195, %v197
  %v200 = vsel %vm198, %v193, %v195
  %v201 = vsel %vm198, %v191, %v193
  %v202 = vsel %vm198, %v189, %v191
  %v203 = vsel %vm198, %v187, %v189
  %v204 = vsel %vm198, %v197, %v187
  %205 = vst [vmem:[#allocation2 + $0x150] sm:$0xff] %v203
  %206 = vst [vmem:[#allocation2 + $0x158] sm:$0xff] %v202
  %207 = vst [vmem:[#allocation2 + $0x160] sm:$0xff] %v201
  %208 = vst [vmem:[#allocation2 + $0x168] sm:$0xff] %v200
  %209 = vst [vmem:[#allocation2 + $0x170] sm:$0xff] %v199
  %210 = vst [vmem:[#allocation2 + $0x178] sm:$0xff] %v204
  %211 = vrot.lane.b32.xlu0 %v20, 109
  %v212 = vpop.permute.xlu0 %211
  %213 = vrot.lane.b32.xlu0 %v21, 109
  %v214 = vpop.permute.xlu0 %213
  %215 = vrot.lane.b32.xlu0 %v22, 109
  %v216 = vpop.permute.xlu0 %215
  %217 = vrot.lane.b32.xlu0 %v23, 109
  %v218 = vpop.permute.xlu0 %217
  %219 = vrot.lane.b32.xlu0 %v24, 109
  %v220 = vpop.permute.xlu0 %219
  %221 = vrot.lane.b32.xlu0 %v25, 109
  %v222 = vpop.permute.xlu0 %221
  %vm223 = vcmp.lt.s32.totalorder %v41, 109
  %v224 = vsel %vm223, %v220, %v222
  %v225 = vsel %vm223, %v218, %v220
  %v226 = vsel %vm223, %v216, %v218
  %v227 = vsel %vm223, %v214, %v216
  %v228 = vsel %vm223, %v212, %v214
  %v229 = vsel %vm223, %v222, %v212
  %230 = vst [vmem:[#allocation2 + $0x180] sm:$0xff] %v228
  %231 = vst [vmem:[#allocation2 + $0x188] sm:$0xff] %v227
  %232 = vst [vmem:[#allocation2 + $0x190] sm:$0xff] %v226
  %233 = vst [vmem:[#allocation2 + $0x198] sm:$0xff] %v225
  %234 = vst [vmem:[#allocation2 + $0x1a0] sm:$0xff] %v224
  %235 = vst [vmem:[#allocation2 + $0x1a8] sm:$0xff] %v229
  %v236 = vld [vmem:[%s2] sm:$0xff]
  %v237 = vld [vmem:[#allocation2] sm:$0xff]
  %v238 = vld [vmem:[#allocation2 + $0x8] sm:$0xff]
  %v239 = vld [vmem:[#allocation2 + $0x10] sm:$0xff]
  %v240 = vld [vmem:[#allocation2 + $0x18] sm:$0xff]
  %v241 = vld [vmem:[#allocation2 + $0x20] sm:$0xff]
  %v242 = vld [vmem:[#allocation2 + $0x28] sm:$0xff]
  %v243 = vld [vmem:[#allocation2 + $0x30] sm:$0xff]
  %v244 = vld [vmem:[#allocation2 + $0x38] sm:$0xff]
  %v245 = vld [vmem:[#allocation2 + $0x40] sm:$0xff]
  %v246 = vld [vmem:[#allocation2 + $0x48] sm:$0xff]
  %v247 = vld [vmem:[#allocation2 + $0x50] sm:$0xff]
  %v248 = vld [vmem:[#allocation2 + $0x58] sm:$0xff]
  %v249 = vld [vmem:[#allocation2 + $0x60] sm:$0xff]
  %v250 = vld [vmem:[#allocation2 + $0x68] sm:$0xff]
  %v251 = vld [vmem:[#allocation2 + $0x70] sm:$0xff]
  %v252 = vld [vmem:[#allocation2 + $0x78] sm:$0xff]
  %v253 = vld [vmem:[#allocation2 + $0x80] sm:$0xff]
  %v254 = vld [vmem:[#allocation2 + $0x88] sm:$0xff]
  %v255 = vld [vmem:[#allocation2 + $0x90] sm:$0xff]
  %v256 = vld [vmem:[#allocation2 + $0x98] sm:$0xff]
  %v257 = vld [vmem:[#allocation2 + $0xa0] sm:$0xff]
  %v258 = vld [vmem:[#allocation2 + $0xa8] sm:$0xff]
  %v259 = vld [vmem:[#allocation2 + $0xb0] sm:$0xff]
  %v260 = vld [vmem:[#allocation2 + $0xb8] sm:$0xff]
  %v261 = vld [vmem:[#allocation2 + $0xc0] sm:$0xff]
  %v262 = vld [vmem:[#allocation2 + $0xc8] sm:$0xff]
  %v263 = vld [vmem:[#allocation2 + $0xd0] sm:$0xff]
  %v264 = vld [vmem:[#allocation2 + $0xd8] sm:$0xff]
  %v265 = vld [vmem:[#allocation2 + $0xe0] sm:$0xff]
  %v266 = vld [vmem:[#allocation2 + $0xe8] sm:$0xff]
  %v267 = vld [vmem:[#allocation2 + $0xf0] sm:$0xff]
  %v268 = vld [vmem:[#allocation2 + $0xf8] sm:$0xff]
  %v269 = vld [vmem:[#allocation2 + $0x100] sm:$0xff]
  %v270 = vld [vmem:[#allocation2 + $0x108] sm:$0xff]
  %v271 = vld [vmem:[#allocation2 + $0x110] sm:$0xff]
  %v272 = vld [vmem:[#allocation2 + $0x118] sm:$0xff]
  %v273 = vld [vmem:[#allocation2 + $0x120] sm:$0xff]
  %v274 = vld [vmem:[#allocation2 + $0x128] sm:$0xff]
  %v275 = vld [vmem:[#allocation2 + $0x130] sm:$0xff]
  %v276 = vld [vmem:[#allocation2 + $0x138] sm:$0xff]
  %v277 = vld [vmem:[#allocation2 + $0x140] sm:$0xff]
  %v278 = vld [vmem:[#allocation2 + $0x148] sm:$0xff]
  %v279 = vld [vmem:[#allocation2 + $0x150] sm:$0xff]
  %v280 = vld [vmem:[#allocation2 + $0x158] sm:$0xff]
  %v281 = vld [vmem:[#allocation2 + $0x160] sm:$0xff]
  %v282 = vld [vmem:[#allocation2 + $0x168] sm:$0xff]
  %v283 = vld [vmem:[#allocation2 + $0x170] sm:$0xff]
  %v284 = vld [vmem:[#allocation2 + $0x178] sm:$0xff]
  %v285 = vld [vmem:[#allocation2 + $0x180] sm:$0xff]
  %v286 = vld [vmem:[#allocation2 + $0x188] sm:$0xff]
  %v287 = vld [vmem:[#allocation2 + $0x190] sm:$0xff]
  %v288 = vld [vmem:[#allocation2 + $0x198] sm:$0xff]
  %v289 = vld [vmem:[#allocation2 + $0x1a0] sm:$0xff]
  %v290 = vld [vmem:[#allocation2 + $0x1a8] sm:$0xff]
  %vm291 = vcmask 588800
  %v293 = vsel %vm291, %v236, 0
  %295 = vmatprep.subr.mxu0 0.0
  %296 = vmatpush1.msra.mxu0 0.0
  %297 = vmatprep.subr.mxu0 0.0
  %298 = vmatpush1.msra.mxu0 0.0
  %299 = vmatprep.subr.mxu0 0.0
  %300 = vmatpush1.msra.mxu0 0.0
  %301 = vmatprep.subr.mxu0 0.0
  %302 = vmatpush1.msra.mxu0 0.0
  %303 = vmatprep.subr.mxu0 0.0
  %304 = vmatpush1.msra.mxu0 0.0
  %305 = vmatprep.subr.mxu0 0.0
  %306 = vmatpush1.msra.mxu0 0.0
  %307 = vmatprep.subr.mxu0 0.0
  %308 = vmatpush1.msra.mxu0 0.0
  %309 = vmatprep.subr.mxu0 %v286
  %310 = vmatpush1.msra.mxu0 %v285
  %311 = vmatprep.subr.mxu0 %v280
  %312 = vmatpush1.msra.mxu0 %v279
  %313 = vmatprep.subr.mxu0 %v274
  %314 = vmatpush1.msra.mxu0 %v273
  %315 = vmatprep.subr.mxu0 %v268
  %316 = vmatpush1.msra.mxu0 %v267
  %317 = vmatprep.subr.mxu0 %v262
  %318 = vmatpush1.msra.mxu0 %v261
  %319 = vmatprep.subr.mxu0 %v256
  %320 = vmatpush1.msra.mxu0 %v255
  %321 = vmatprep.subr.mxu0 %v250
  %322 = vmatpush1.msra.mxu0 %v249
  %323 = vmatprep.subr.mxu0 %v244
  %324 = vmatpush1.msra.mxu0 %v243
  %325 = vmatprep.subr.mxu0 %v238
  %326 = vmatpush1.msra.mxu0 %v237
  %327 = vmatprep.subr.mxu0 0.0
  %328 = vmatpush2.msra.mxu0 0.0
  %329 = vmatprep.subr.mxu0 0.0
  %330 = vmatpush2.msra.mxu0 0.0
  %331 = vmatprep.subr.mxu0 0.0
  %332 = vmatpush2.msra.mxu0 0.0
  %333 = vmatprep.subr.mxu0 0.0
  %334 = vmatpush2.msra.mxu0 0.0
  %335 = vmatprep.subr.mxu0 0.0
  %336 = vmatpush2.msra.mxu0 0.0
  %337 = vmatprep.subr.mxu0 0.0
  %338 = vmatpush2.msra.mxu0 0.0
  %339 = vmatprep.subr.mxu0 0.0
  %340 = vmatpush2.msra.mxu0 0.0
  %341 = vmatprep.subr.mxu0 0.0
  %342 = vmatpush2.msra.mxu0 0.0
  %343 = vmatprep.subr.mxu0 0.0
  %344 = vmatpush2.msra.mxu0 0.0
  %345 = vmatprep.subr.mxu0 0.0
  %346 = vmatpush2.msra.mxu0 0.0
  %347 = vmatprep.subr.mxu0 0.0
  %348 = vmatpush2.msra.mxu0 0.0
  %349 = vmatprep.subr.mxu0 0.0
  %350 = vmatpush2.msra.mxu0 0.0
  %351 = vmatprep.subr.mxu0 0.0
  %352 = vmatpush2.msra.mxu0 0.0
  %353 = vmatprep.subr.mxu0 0.0
  %354 = vmatpush2.msra.mxu0 0.0
  %355 = vmatprep.subr.mxu0 0.0
  %356 = vmatpush2.msra.mxu0 0.0
  %357 = vmatprep.subr.mxu0 0.0
  %358 = vmatpush2.msra.mxu0 0.0
  %359 = vmatprep.mubr.f32.mxu0 0.0
  %360 = vmatmul.mubr.f32.gmra.mxu0 %v293
  %v361 = vpop.f32.mrf.mxu0
  %v362 = vadd.f32 0.0, %v361
  %v363 = vpop.f32.mrf.mxu0
  %v364 = vadd.f32 0.0, %v363
  %365 = vdwg.mxu0
  %366 = vmatprep.subr.mxu0 0.0
  %367 = vmatpush1.msra.mxu0 0.0
  %368 = vmatprep.subr.mxu0 0.0
  %369 = vmatpush1.msra.mxu0 0.0
  %370 = vmatprep.subr.mxu0 0.0
  %371 = vmatpush1.msra.mxu0 0.0
  %372 = vmatprep.subr.mxu0 0.0
  %373 = vmatpush1.msra.mxu0 0.0
  %374 = vmatprep.subr.mxu0 0.0
  %375 = vmatpush1.msra.mxu0 0.0
  %376 = vmatprep.subr.mxu0 0.0
  %377 = vmatpush1.msra.mxu0 0.0
  %378 = vmatprep.subr.mxu0 0.0
  %379 = vmatpush1.msra.mxu0 0.0
  %380 = vmatprep.subr.mxu0 %v288
  %381 = vmatpush1.msra.mxu0 %v287
  %382 = vmatprep.subr.mxu0 %v282
  %383 = vmatpush1.msra.mxu0 %v281
  %384 = vmatprep.subr.mxu0 %v276
  %385 = vmatpush1.msra.mxu0 %v275
  %386 = vmatprep.subr.mxu0 %v270
  %387 = vmatpush1.msra.mxu0 %v269
  %388 = vmatprep.subr.mxu0 %v264
  %389 = vmatpush1.msra.mxu0 %v263
  %390 = vmatprep.subr.mxu0 %v258
  %391 = vmatpush1.msra.mxu0 %v257
  %392 = vmatprep.subr.mxu0 %v252
  %393 = vmatpush1.msra.mxu0 %v251
  %394 = vmatprep.subr.mxu0 %v246
  %395 = vmatpush1.msra.mxu0 %v245
  %396 = vmatprep.subr.mxu0 %v240
  %397 = vmatpush1.msra.mxu0 %v239
  %398 = vmatprep.subr.mxu0 0.0
  %399 = vmatpush2.msra.mxu0 0.0
  %400 = vmatprep.subr.mxu0 0.0
  %401 = vmatpush2.msra.mxu0 0.0
  %402 = vmatprep.subr.mxu0 0.0
  %403 = vmatpush2.msra.mxu0 0.0
  %404 = vmatprep.subr.mxu0 0.0
  %405 = vmatpush2.msra.mxu0 0.0
  %406 = vmatprep.subr.mxu0 0.0
  %407 = vmatpush2.msra.mxu0 0.0
  %408 = vmatprep.subr.mxu0 0.0
  %409 = vmatpush2.msra.mxu0 0.0
  %410 = vmatprep.subr.mxu0 0.0
  %411 = vmatpush2.msra.mxu0 0.0
  %412 = vmatprep.subr.mxu0 0.0
  %413 = vmatpush2.msra.mxu0 0.0
  %414 = vmatprep.subr.mxu0 0.0
  %415 = vmatpush2.msra.mxu0 0.0
  %416 = vmatprep.subr.mxu0 0.0
  %417 = vmatpush2.msra.mxu0 0.0
  %418 = vmatprep.subr.mxu0 0.0
  %419 = vmatpush2.msra.mxu0 0.0
  %420 = vmatprep.subr.mxu0 0.0
  %421 = vmatpush2.msra.mxu0 0.0
  %422 = vmatprep.subr.mxu0 0.0
  %423 = vmatpush2.msra.mxu0 0.0
  %424 = vmatprep.subr.mxu0 0.0
  %425 = vmatpush2.msra.mxu0 0.0
  %426 = vmatprep.subr.mxu0 0.0
  %427 = vmatpush2.msra.mxu0 0.0
  %428 = vmatprep.subr.mxu0 0.0
  %429 = vmatpush2.msra.mxu0 0.0
  %430 = vmatprep.mubr.f32.mxu0 0.0
  %431 = vmatmul.mubr.f32.gmra.mxu0 %v293
  %v432 = vpop.f32.mrf.mxu0
  %v433 = vadd.f32 0.0, %v432
  %v434 = vpop.f32.mrf.mxu0
  %v435 = vadd.f32 0.0, %v434
  %436 = vdwg.mxu0
  %437 = vmatprep.subr.mxu0 0.0
  %438 = vmatpush1.msra.mxu0 0.0
  %439 = vmatprep.subr.mxu0 0.0
  %440 = vmatpush1.msra.mxu0 0.0
  %441 = vmatprep.subr.mxu0 0.0
  %442 = vmatpush1.msra.mxu0 0.0
  %443 = vmatprep.subr.mxu0 0.0
  %444 = vmatpush1.msra.mxu0 0.0
  %445 = vmatprep.subr.mxu0 0.0
  %446 = vmatpush1.msra.mxu0 0.0
  %447 = vmatprep.subr.mxu0 0.0
  %448 = vmatpush1.msra.mxu0 0.0
  %449 = vmatprep.subr.mxu0 0.0
  %450 = vmatpush1.msra.mxu0 0.0
  %451 = vmatprep.subr.mxu0 %v290
  %452 = vmatpush1.msra.mxu0 %v289
  %453 = vmatprep.subr.mxu0 %v284
  %454 = vmatpush1.msra.mxu0 %v283
  %455 = vmatprep.subr.mxu0 %v278
  %456 = vmatpush1.msra.mxu0 %v277
  %457 = vmatprep.subr.mxu0 %v272
  %458 = vmatpush1.msra.mxu0 %v271
  %459 = vmatprep.subr.mxu0 %v266
  %460 = vmatpush1.msra.mxu0 %v265
  %461 = vmatprep.subr.mxu0 %v260
  %462 = vmatpush1.msra.mxu0 %v259
  %463 = vmatprep.subr.mxu0 %v254
  %464 = vmatpush1.msra.mxu0 %v253
  %465 = vmatprep.subr.mxu0 %v248
  %466 = vmatpush1.msra.mxu0 %v247
  %467 = vmatprep.subr.mxu0 %v242
  %468 = vmatpush1.msra.mxu0 %v241
  %469 = vmatprep.subr.mxu0 0.0
  %470 = vmatpush2.msra.mxu0 0.0
  %471 = vmatprep.subr.mxu0 0.0
  %472 = vmatpush2.msra.mxu0 0.0
  %473 = vmatprep.subr.mxu0 0.0
  %474 = vmatpush2.msra.mxu0 0.0
  %475 = vmatprep.subr.mxu0 0.0
  %476 = vmatpush2.msra.mxu0 0.0
  %477 = vmatprep.subr.mxu0 0.0
  %478 = vmatpush2.msra.mxu0 0.0
  %479 = vmatprep.subr.mxu0 0.0
  %480 = vmatpush2.msra.mxu0 0.0
  %481 = vmatprep.subr.mxu0 0.0
  %482 = vmatpush2.msra.mxu0 0.0
  %483 = vmatprep.subr.mxu0 0.0
  %484 = vmatpush2.msra.mxu0 0.0
  %485 = vmatprep.subr.mxu0 0.0
  %486 = vmatpush2.msra.mxu0 0.0
  %487 = vmatprep.subr.mxu0 0.0
  %488 = vmatpush2.msra.mxu0 0.0
  %489 = vmatprep.subr.mxu0 0.0
  %490 = vmatpush2.msra.mxu0 0.0
  %491 = vmatprep.subr.mxu0 0.0
  %492 = vmatpush2.msra.mxu0 0.0
  %493 = vmatprep.subr.mxu0 0.0
  %494 = vmatpush2.msra.mxu0 0.0
  %495 = vmatprep.subr.mxu0 0.0
  %496 = vmatpush2.msra.mxu0 0.0
  %497 = vmatprep.subr.mxu0 0.0
  %498 = vmatpush2.msra.mxu0 0.0
  %499 = vmatprep.subr.mxu0 0.0
  %500 = vmatpush2.msra.mxu0 0.0
  %501 = vmatprep.mubr.f32.mxu0 0.0
  %502 = vmatmul.mubr.f32.gmra.mxu0 %v293
  %v503 = vpop.f32.mrf.mxu0
  %v504 = vadd.f32 0.0, %v503
  %v505 = vpop.f32.mrf.mxu0
  %v506 = vadd.f32 0.0, %v505
  %507 = vdwg.mxu0
  %v509 = vlaneseq
  %v510 = vshrl.u32 %v509, 7
  %v511 = vsub.s32 0, %v510
  %v512 = vrot.slane %v26, %v511
  %v513 = vlaneseq
  %v514 = vshrl.u32 %v513, 7
  %v515 = vsub.s32 1, %v514
  %v516 = vrot.slane %v26, %v515
  %v517 = vlaneseq
  %v518 = vshrl.u32 %v517, 7
  %v519 = vsub.s32 2, %v518
  %v520 = vrot.slane %v26, %v519
  %v521 = vlaneseq
  %v522 = vshrl.u32 %v521, 7
  %v523 = vsub.s32 3, %v522
  %v524 = vrot.slane %v26, %v523
  %v525 = vlaneseq
  %v526 = vshrl.u32 %v525, 7
  %v527 = vsub.s32 4, %v526
  %v528 = vrot.slane %v26, %v527
  %v529 = vlaneseq
  %v530 = vshrl.u32 %v529, 7
  %v531 = vsub.s32 5, %v530
  %v532 = vrot.slane %v26, %v531
  %v539 = vmul.f32 %v362, %v512
  %v540 = vmul.f32 %v364, %v516
  %v541 = vmul.f32 %v433, %v520
  %v542 = vmul.f32 %v435, %v524
  %v543 = vmul.f32 %v504, %v528
  %v544 = vmul.f32 %v506, %v532
  %v545 = vadd.f32 %v539, %v540
  %v546 = vadd.f32 %v545, %v541
  %v547 = vadd.f32 %v546, %v542
  %v548 = vadd.f32 %v547, %v543
  %v549 = vadd.f32 %v548, %v544
  %550 = vadd.xlane.f32.xlu0 %v549
  %v551 = vpop.xlane.xlu0 %550
  %v552 = vmul.f32 %v539, %v362
  %v553 = vmul.f32 %v540, %v364
  %v554 = vmul.f32 %v541, %v433
  %v555 = vmul.f32 %v542, %v435
  %v556 = vmul.f32 %v543, %v504
  %v557 = vmul.f32 %v544, %v506
  %v558 = vadd.f32 %v552, %v553
  %v559 = vadd.f32 %v558, %v554
  %v560 = vadd.f32 %v559, %v555
  %v561 = vadd.f32 %v560, %v556
  %v562 = vadd.f32 %v561, %v557
  %563 = vadd.xlane.f32.xlu0 %v562
  %v564 = vpop.xlane.xlu0 %563
  %v565 = vmul.f32 %v551, 0.001953125
  %v566 = vmul.f32 %v564, 0.001953125
  %v567 = vmul.f32 %v565, %v565
  %v568 = vsub.f32 %v566, %v567
  %v569 = vadd.f32 %v568, 1e-05
  %v570 = vrsqrt.pop %v569
  %v571 = vmul.f32 %v27, %v570
  %v572 = vmul.f32 %v565, %v571
  %574 = vrot.lane.b32.xlu0 %v572, 1
  %v575 = vpop.permute.xlu0 %574
  %v577 = vsub.f32 %v27, %v575
  %579 = vset.pattern.permute.xlu0 0
  %580 = vperm.xlu0 %579, %v571
  %v581 = vpop.permute.xlu0 %580
  %v583 = vmul.f32 %v362, %v581
  %v584 = vmul.f32 %v364, %v581
  %v585 = vmul.f32 %v433, %v581
  %v586 = vmul.f32 %v435, %v581
  %v587 = vmul.f32 %v504, %v581
  %v588 = vmul.f32 %v506, %v581
  %590 = vset.pattern.permute.xlu0 1
  %591 = vperm.xlu0 %590, %v577
  %v592 = vpop.permute.xlu0 %591
  %v594 = vadd.f32 %v583, %v592
  %v595 = vadd.f32 %v584, %v592
  %v596 = vadd.f32 %v585, %v592
  %v597 = vadd.f32 %v586, %v592
  %v598 = vadd.f32 %v587, %v592
  %v599 = vadd.f32 %v588, %v592
  %v600 = vmax.f32 %v594, 0.0
  %v601 = vmax.f32 %v595, 0.0
  %v602 = vmax.f32 %v596, 0.0
  %v603 = vmax.f32 %v597, 0.0
  %v604 = vmax.f32 %v598, 0.0
  %v605 = vmax.f32 %v599, 0.0
  %v606 = vmul.f32 %v600, %v512
  %v607 = vmul.f32 %v601, %v516
  %v608 = vmul.f32 %v602, %v520
  %v609 = vmul.f32 %v603, %v524
  %v610 = vmul.f32 %v604, %v528
  %v611 = vmul.f32 %v605, %v532
  %612 = vrot.lane.b32.xlu0 %v606, 19
  %v613 = vpop.permute.xlu0 %612
  %614 = vrot.lane.b32.xlu0 %v607, 19
  %v615 = vpop.permute.xlu0 %614
  %616 = vrot.lane.b32.xlu0 %v608, 19
  %v617 = vpop.permute.xlu0 %616
  %618 = vrot.lane.b32.xlu0 %v609, 19
  %v619 = vpop.permute.xlu0 %618
  %620 = vrot.lane.b32.xlu0 %v610, 19
  %v621 = vpop.permute.xlu0 %620
  %622 = vrot.lane.b32.xlu0 %v611, 19
  %v623 = vpop.permute.xlu0 %622
  %v624 = vsel %vm42, %v621, %v623
  %v625 = vsel %vm42, %v619, %v621
  %v626 = vsel %vm42, %v617, %v619
  %v627 = vsel %vm42, %v615, %v617
  %v628 = vsel %vm42, %v613, %v615
  %v629 = vsel %vm42, %v623, %v613
  %630 = vst [vmem:[#allocation2] sm:$0xff] %v629
  %631 = vst [vmem:[#allocation2 + $0x8] sm:$0xff] %v628
  %632 = vst [vmem:[#allocation2 + $0x10] sm:$0xff] %v627
  %633 = vst [vmem:[#allocation2 + $0x18] sm:$0xff] %v626
  %634 = vst [vmem:[#allocation2 + $0x20] sm:$0xff] %v625
  %635 = vst [vmem:[#allocation2 + $0x28] sm:$0xff] %v624
  %636 = vrot.lane.b32.xlu0 %v606, 18
  %v637 = vpop.permute.xlu0 %636
  %638 = vrot.lane.b32.xlu0 %v607, 18
  %v639 = vpop.permute.xlu0 %638
  %640 = vrot.lane.b32.xlu0 %v608, 18
  %v641 = vpop.permute.xlu0 %640
  %642 = vrot.lane.b32.xlu0 %v609, 18
  %v643 = vpop.permute.xlu0 %642
  %644 = vrot.lane.b32.xlu0 %v610, 18
  %v645 = vpop.permute.xlu0 %644
  %646 = vrot.lane.b32.xlu0 %v611, 18
  %v647 = vpop.permute.xlu0 %646
  %v648 = vsel %vm67, %v645, %v647
  %v649 = vsel %vm67, %v643, %v645
  %v650 = vsel %vm67, %v641, %v643
  %v651 = vsel %vm67, %v639, %v641
  %v652 = vsel %vm67, %v637, %v639
  %v653 = vsel %vm67, %v647, %v637
  %654 = vst [vmem:[#allocation2 + $0x30] sm:$0xff] %v653
  %655 = vst [vmem:[#allocation2 + $0x38] sm:$0xff] %v652
  %656 = vst [vmem:[#allocation2 + $0x40] sm:$0xff] %v651
  %657 = vst [vmem:[#allocation2 + $0x48] sm:$0xff] %v650
  %658 = vst [vmem:[#allocation2 + $0x50] sm:$0xff] %v649
  %659 = vst [vmem:[#allocation2 + $0x58] sm:$0xff] %v648
  %660 = vrot.lane.b32.xlu0 %v606, 17
  %v661 = vpop.permute.xlu0 %660
  %662 = vrot.lane.b32.xlu0 %v607, 17
  %v663 = vpop.permute.xlu0 %662
  %664 = vrot.lane.b32.xlu0 %v608, 17
  %v665 = vpop.permute.xlu0 %664
  %666 = vrot.lane.b32.xlu0 %v609, 17
  %v667 = vpop.permute.xlu0 %666
  %668 = vrot.lane.b32.xlu0 %v610, 17
  %v669 = vpop.permute.xlu0 %668
  %670 = vrot.lane.b32.xlu0 %v611, 17
  %v671 = vpop.permute.xlu0 %670
  %v672 = vsel %vm92, %v669, %v671
  %v673 = vsel %vm92, %v667, %v669
  %v674 = vsel %vm92, %v665, %v667
  %v675 = vsel %vm92, %v663, %v665
  %v676 = vsel %vm92, %v661, %v663
  %v677 = vsel %vm92, %v671, %v661
  %678 = vst [vmem:[#allocation2 + $0x60] sm:$0xff] %v677
  %679 = vst [vmem:[#allocation2 + $0x68] sm:$0xff] %v676
  %680 = vst [vmem:[#allocation2 + $0x70] sm:$0xff] %v675
  %681 = vst [vmem:[#allocation2 + $0x78] sm:$0xff] %v674
  %682 = vst [vmem:[#allocation2 + $0x80] sm:$0xff] %v673
  %683 = vst [vmem:[#allocation2 + $0x88] sm:$0xff] %v672
  %684 = vrot.lane.b32.xlu0 %v606, 1
  %v685 = vpop.permute.xlu0 %684
  %686 = vrot.lane.b32.xlu0 %v607, 1
  %v687 = vpop.permute.xlu0 %686
  %688 = vrot.lane.b32.xlu0 %v608, 1
  %v689 = vpop.permute.xlu0 %688
  %690 = vrot.lane.b32.xlu0 %v609, 1
  %v691 = vpop.permute.xlu0 %690
  %692 = vrot.lane.b32.xlu0 %v610, 1
  %v693 = vpop.permute.xlu0 %692
  %694 = vrot.lane.b32.xlu0 %v611, 1
  %v695 = vpop.permute.xlu0 %694
  %v696 = vsel %vm117, %v693, %v695
  %v697 = vsel %vm117, %v691, %v693
  %v698 = vsel %vm117, %v689, %v691
  %v699 = vsel %vm117, %v687, %v689
  %v700 = vsel %vm117, %v685, %v687
  %v701 = vsel %vm117, %v695, %v685
  %702 = vst [vmem:[#allocation2 + $0x90] sm:$0xff] %v701
  %703 = vst [vmem:[#allocation2 + $0x98] sm:$0xff] %v700
  %704 = vst [vmem:[#allocation2 + $0xa0] sm:$0xff] %v699
  %705 = vst [vmem:[#allocation2 + $0xa8] sm:$0xff] %v698
  %706 = vst [vmem:[#allocation2 + $0xb0] sm:$0xff] %v697
  %707 = vst [vmem:[#allocation2 + $0xb8] sm:$0xff] %v696
  %708 = vst [vmem:[#allocation2 + $0xc0] sm:$0xff] %v606
  %709 = vst [vmem:[#allocation2 + $0xc8] sm:$0xff] %v607
  %710 = vst [vmem:[#allocation2 + $0xd0] sm:$0xff] %v608
  %711 = vst [vmem:[#allocation2 + $0xd8] sm:$0xff] %v609
  %712 = vst [vmem:[#allocation2 + $0xe0] sm:$0xff] %v610
  %713 = vst [vmem:[#allocation2 + $0xe8] sm:$0xff] %v611
  %714 = vrot.lane.b32.xlu0 %v606, 127
  %v715 = vpop.permute.xlu0 %714
  %716 = vrot.lane.b32.xlu0 %v607, 127
  %v717 = vpop.permute.xlu0 %716
  %718 = vrot.lane.b32.xlu0 %v608, 127
  %v719 = vpop.permute.xlu0 %718
  %720 = vrot.lane.b32.xlu0 %v609, 127
  %v721 = vpop.permute.xlu0 %720
  %722 = vrot.lane.b32.xlu0 %v610, 127
  %v723 = vpop.permute.xlu0 %722
  %724 = vrot.lane.b32.xlu0 %v611, 127
  %v725 = vpop.permute.xlu0 %724
  %v726 = vsel %vm148, %v723, %v725
  %v727 = vsel %vm148, %v721, %v723
  %v728 = vsel %vm148, %v719, %v721
  %v729 = vsel %vm148, %v717, %v719
  %v730 = vsel %vm148, %v715, %v717
  %v731 = vsel %vm148, %v725, %v715
  %732 = vst [vmem:[#allocation2 + $0xf0] sm:$0xff] %v730
  %733 = vst [vmem:[#allocation2 + $0xf8] sm:$0xff] %v729
  %734 = vst [vmem:[#allocation2 + $0x100] sm:$0xff] %v728
  %735 = vst [vmem:[#allocation2 + $0x108] sm:$0xff] %v727
  %736 = vst [vmem:[#allocation2 + $0x110] sm:$0xff] %v726
  %737 = vst [vmem:[#allocation2 + $0x118] sm:$0xff] %v731
  %738 = vrot.lane.b32.xlu0 %v606, 111
  %v739 = vpop.permute.xlu0 %738
  %740 = vrot.lane.b32.xlu0 %v607, 111
  %v741 = vpop.permute.xlu0 %740
  %742 = vrot.lane.b32.xlu0 %v608, 111
  %v743 = vpop.permute.xlu0 %742
  %744 = vrot.lane.b32.xlu0 %v609, 111
  %v745 = vpop.permute.xlu0 %744
  %746 = vrot.lane.b32.xlu0 %v610, 111
  %v747 = vpop.permute.xlu0 %746
  %748 = vrot.lane.b32.xlu0 %v611, 111
  %v749 = vpop.permute.xlu0 %748
  %v750 = vsel %vm173, %v747, %v749
  %v751 = vsel %vm173, %v745, %v747
  %v752 = vsel %vm173, %v743, %v745
  %v753 = vsel %vm173, %v741, %v743
  %v754 = vsel %vm173, %v739, %v741
  %v755 = vsel %vm173, %v749, %v739
  %756 = vst [vmem:[#allocation2 + $0x120] sm:$0xff] %v754
  %757 = vst [vmem:[#allocation2 + $0x128] sm:$0xff] %v753
  %758 = vst [vmem:[#allocation2 + $0x130] sm:$0xff] %v752
  %759 = vst [vmem:[#allocation2 + $0x138] sm:$0xff] %v751
  %760 = vst [vmem:[#allocation2 + $0x140] sm:$0xff] %v750
  %761 = vst [vmem:[#allocation2 + $0x148] sm:$0xff] %v755
  %762 = vrot.lane.b32.xlu0 %v606, 110
  %v763 = vpop.permute.xlu0 %762
  %764 = vrot.lane.b32.xlu0 %v607, 110
  %v765 = vpop.permute.xlu0 %764
  %766 = vrot.lane.b32.xlu0 %v608, 110
  %v767 = vpop.permute.xlu0 %766
  %768 = vrot.lane.b32.xlu0 %v609, 110
  %v769 = vpop.permute.xlu0 %768
  %770 = vrot.lane.b32.xlu0 %v610, 110
  %v771 = vpop.permute.xlu0 %770
  %772 = vrot.lane.b32.xlu0 %v611, 110
  %v773 = vpop.permute.xlu0 %772
  %v774 = vsel %vm198, %v771, %v773
  %v775 = vsel %vm198, %v769, %v771
  %v776 = vsel %vm198, %v767, %v769
  %v777 = vsel %vm198, %v765, %v767
  %v778 = vsel %vm198, %v763, %v765
  %v779 = vsel %vm198, %v773, %v763
  %780 = vst [vmem:[#allocation2 + $0x150] sm:$0xff] %v778
  %781 = vst [vmem:[#allocation2 + $0x158] sm:$0xff] %v777
  %782 = vst [vmem:[#allocation2 + $0x160] sm:$0xff] %v776
  %783 = vst [vmem:[#allocation2 + $0x168] sm:$0xff] %v775
  %784 = vst [vmem:[#allocation2 + $0x170] sm:$0xff] %v774
  %785 = vst [vmem:[#allocation2 + $0x178] sm:$0xff] %v779
  %786 = vrot.lane.b32.xlu0 %v606, 109
  %v787 = vpop.permute.xlu0 %786
  %788 = vrot.lane.b32.xlu0 %v607, 109
  %v789 = vpop.permute.xlu0 %788
  %790 = vrot.lane.b32.xlu0 %v608, 109
  %v791 = vpop.permute.xlu0 %790
  %792 = vrot.lane.b32.xlu0 %v609, 109
  %v793 = vpop.permute.xlu0 %792
  %794 = vrot.lane.b32.xlu0 %v610, 109
  %v795 = vpop.permute.xlu0 %794
  %796 = vrot.lane.b32.xlu0 %v611, 109
  %v797 = vpop.permute.xlu0 %796
  %v798 = vsel %vm223, %v795, %v797
  %v799 = vsel %vm223, %v793, %v795
  %v800 = vsel %vm223, %v791, %v793
  %v801 = vsel %vm223, %v789, %v791
  %v802 = vsel %vm223, %v787, %v789
  %v803 = vsel %vm223, %v797, %v787
  %804 = vst [vmem:[#allocation2 + $0x180] sm:$0xff] %v802
  %805 = vst [vmem:[#allocation2 + $0x188] sm:$0xff] %v801
  %806 = vst [vmem:[#allocation2 + $0x190] sm:$0xff] %v800
  %807 = vst [vmem:[#allocation2 + $0x198] sm:$0xff] %v799
  %808 = vst [vmem:[#allocation2 + $0x1a0] sm:$0xff] %v798
  %809 = vst [vmem:[#allocation2 + $0x1a8] sm:$0xff] %v803
  %v810 = vld [vmem:[%s3] sm:$0xff]
  %v811 = vld [vmem:[#allocation2] sm:$0xff]
  %v812 = vld [vmem:[#allocation2 + $0x8] sm:$0xff]
  %v813 = vld [vmem:[#allocation2 + $0x10] sm:$0xff]
  %v814 = vld [vmem:[#allocation2 + $0x18] sm:$0xff]
  %v815 = vld [vmem:[#allocation2 + $0x20] sm:$0xff]
  %v816 = vld [vmem:[#allocation2 + $0x28] sm:$0xff]
  %v817 = vld [vmem:[#allocation2 + $0x30] sm:$0xff]
  %v818 = vld [vmem:[#allocation2 + $0x38] sm:$0xff]
  %v819 = vld [vmem:[#allocation2 + $0x40] sm:$0xff]
  %v820 = vld [vmem:[#allocation2 + $0x48] sm:$0xff]
  %v821 = vld [vmem:[#allocation2 + $0x50] sm:$0xff]
  %v822 = vld [vmem:[#allocation2 + $0x58] sm:$0xff]
  %v823 = vld [vmem:[#allocation2 + $0x60] sm:$0xff]
  %v824 = vld [vmem:[#allocation2 + $0x68] sm:$0xff]
  %v825 = vld [vmem:[#allocation2 + $0x70] sm:$0xff]
  %v826 = vld [vmem:[#allocation2 + $0x78] sm:$0xff]
  %v827 = vld [vmem:[#allocation2 + $0x80] sm:$0xff]
  %v828 = vld [vmem:[#allocation2 + $0x88] sm:$0xff]
  %v829 = vld [vmem:[#allocation2 + $0x90] sm:$0xff]
  %v830 = vld [vmem:[#allocation2 + $0x98] sm:$0xff]
  %v831 = vld [vmem:[#allocation2 + $0xa0] sm:$0xff]
  %v832 = vld [vmem:[#allocation2 + $0xa8] sm:$0xff]
  %v833 = vld [vmem:[#allocation2 + $0xb0] sm:$0xff]
  %v834 = vld [vmem:[#allocation2 + $0xb8] sm:$0xff]
  %v835 = vld [vmem:[#allocation2 + $0xc0] sm:$0xff]
  %v836 = vld [vmem:[#allocation2 + $0xc8] sm:$0xff]
  %v837 = vld [vmem:[#allocation2 + $0xd0] sm:$0xff]
  %v838 = vld [vmem:[#allocation2 + $0xd8] sm:$0xff]
  %v839 = vld [vmem:[#allocation2 + $0xe0] sm:$0xff]
  %v840 = vld [vmem:[#allocation2 + $0xe8] sm:$0xff]
  %v841 = vld [vmem:[#allocation2 + $0xf0] sm:$0xff]
  %v842 = vld [vmem:[#allocation2 + $0xf8] sm:$0xff]
  %v843 = vld [vmem:[#allocation2 + $0x100] sm:$0xff]
  %v844 = vld [vmem:[#allocation2 + $0x108] sm:$0xff]
  %v845 = vld [vmem:[#allocation2 + $0x110] sm:$0xff]
  %v846 = vld [vmem:[#allocation2 + $0x118] sm:$0xff]
  %v847 = vld [vmem:[#allocation2 + $0x120] sm:$0xff]
  %v848 = vld [vmem:[#allocation2 + $0x128] sm:$0xff]
  %v849 = vld [vmem:[#allocation2 + $0x130] sm:$0xff]
  %v850 = vld [vmem:[#allocation2 + $0x138] sm:$0xff]
  %v851 = vld [vmem:[#allocation2 + $0x140] sm:$0xff]
  %v852 = vld [vmem:[#allocation2 + $0x148] sm:$0xff]
  %v853 = vld [vmem:[#allocation2 + $0x150] sm:$0xff]
  %v854 = vld [vmem:[#allocation2 + $0x158] sm:$0xff]
  %v855 = vld [vmem:[#allocation2 + $0x160] sm:$0xff]
  %v856 = vld [vmem:[#allocation2 + $0x168] sm:$0xff]
  %v857 = vld [vmem:[#allocation2 + $0x170] sm:$0xff]
  %v858 = vld [vmem:[#allocation2 + $0x178] sm:$0xff]
  %v859 = vld [vmem:[#allocation2 + $0x180] sm:$0xff]
  %v860 = vld [vmem:[#allocation2 + $0x188] sm:$0xff]
  %v861 = vld [vmem:[#allocation2 + $0x190] sm:$0xff]
  %v862 = vld [vmem:[#allocation2 + $0x198] sm:$0xff]
  %v863 = vld [vmem:[#allocation2 + $0x1a0] sm:$0xff]
  %v864 = vld [vmem:[#allocation2 + $0x1a8] sm:$0xff]
  %v866 = vsel %vm291, %v810, 0
  %868 = vmatprep.subr.mxu0 0.0
  %869 = vmatpush1.msra.mxu0 0.0
  %870 = vmatprep.subr.mxu0 0.0
  %871 = vmatpush1.msra.mxu0 0.0
  %872 = vmatprep.subr.mxu0 0.0
  %873 = vmatpush1.msra.mxu0 0.0
  %874 = vmatprep.subr.mxu0 0.0
  %875 = vmatpush1.msra.mxu0 0.0
  %876 = vmatprep.subr.mxu0 0.0
  %877 = vmatpush1.msra.mxu0 0.0
  %878 = vmatprep.subr.mxu0 0.0
  %879 = vmatpush1.msra.mxu0 0.0
  %880 = vmatprep.subr.mxu0 0.0
  %881 = vmatpush1.msra.mxu0 0.0
  %882 = vmatprep.subr.mxu0 %v860
  %883 = vmatpush1.msra.mxu0 %v859
  %884 = vmatprep.subr.mxu0 %v854
  %885 = vmatpush1.msra.mxu0 %v853
  %886 = vmatprep.subr.mxu0 %v848
  %887 = vmatpush1.msra.mxu0 %v847
  %888 = vmatprep.subr.mxu0 %v842
  %889 = vmatpush1.msra.mxu0 %v841
  %890 = vmatprep.subr.mxu0 %v836
  %891 = vmatpush1.msra.mxu0 %v835
  %892 = vmatprep.subr.mxu0 %v830
  %893 = vmatpush1.msra.mxu0 %v829
  %894 = vmatprep.subr.mxu0 %v824
  %895 = vmatpush1.msra.mxu0 %v823
  %896 = vmatprep.subr.mxu0 %v818
  %897 = vmatpush1.msra.mxu0 %v817
  %898 = vmatprep.subr.mxu0 %v812
  %899 = vmatpush1.msra.mxu0 %v811
  %900 = vmatprep.subr.mxu0 0.0
  %901 = vmatpush2.msra.mxu0 0.0
  %902 = vmatprep.subr.mxu0 0.0
  %903 = vmatpush2.msra.mxu0 0.0
  %904 = vmatprep.subr.mxu0 0.0
  %905 = vmatpush2.msra.mxu0 0.0
  %906 = vmatprep.subr.mxu0 0.0
  %907 = vmatpush2.msra.mxu0 0.0
  %908 = vmatprep.subr.mxu0 0.0
  %909 = vmatpush2.msra.mxu0 0.0
  %910 = vmatprep.subr.mxu0 0.0
  %911 = vmatpush2.msra.mxu0 0.0
  %912 = vmatprep.subr.mxu0 0.0
  %913 = vmatpush2.msra.mxu0 0.0
  %914 = vmatprep.subr.mxu0 0.0
  %915 = vmatpush2.msra.mxu0 0.0
  %916 = vmatprep.subr.mxu0 0.0
  %917 = vmatpush2.msra.mxu0 0.0
  %918 = vmatprep.subr.mxu0 0.0
  %919 = vmatpush2.msra.mxu0 0.0
  %920 = vmatprep.subr.mxu0 0.0
  %921 = vmatpush2.msra.mxu0 0.0
  %922 = vmatprep.subr.mxu0 0.0
  %923 = vmatpush2.msra.mxu0 0.0
  %924 = vmatprep.subr.mxu0 0.0
  %925 = vmatpush2.msra.mxu0 0.0
  %926 = vmatprep.subr.mxu0 0.0
  %927 = vmatpush2.msra.mxu0 0.0
  %928 = vmatprep.subr.mxu0 0.0
  %929 = vmatpush2.msra.mxu0 0.0
  %930 = vmatprep.subr.mxu0 0.0
  %931 = vmatpush2.msra.mxu0 0.0
  %932 = vmatprep.mubr.f32.mxu0 0.0
  %933 = vmatmul.mubr.f32.gmra.mxu0 %v866
  %v934 = vpop.f32.mrf.mxu0
  %v935 = vadd.f32 0.0, %v934
  %v936 = vpop.f32.mrf.mxu0
  %v937 = vadd.f32 0.0, %v936
  %938 = vdwg.mxu0
  %939 = vmatprep.subr.mxu0 0.0
  %940 = vmatpush1.msra.mxu0 0.0
  %941 = vmatprep.subr.mxu0 0.0
  %942 = vmatpush1.msra.mxu0 0.0
  %943 = vmatprep.subr.mxu0 0.0
  %944 = vmatpush1.msra.mxu0 0.0
  %945 = vmatprep.subr.mxu0 0.0
  %946 = vmatpush1.msra.mxu0 0.0
  %947 = vmatprep.subr.mxu0 0.0
  %948 = vmatpush1.msra.mxu0 0.0
  %949 = vmatprep.subr.mxu0 0.0
  %950 = vmatpush1.msra.mxu0 0.0
  %951 = vmatprep.subr.mxu0 0.0
  %952 = vmatpush1.msra.mxu0 0.0
  %953 = vmatprep.subr.mxu0 %v862
  %954 = vmatpush1.msra.mxu0 %v861
  %955 = vmatprep.subr.mxu0 %v856
  %956 = vmatpush1.msra.mxu0 %v855
  %957 = vmatprep.subr.mxu0 %v850
  %958 = vmatpush1.msra.mxu0 %v849
  %959 = vmatprep.subr.mxu0 %v844
  %960 = vmatpush1.msra.mxu0 %v843
  %961 = vmatprep.subr.mxu0 %v838
  %962 = vmatpush1.msra.mxu0 %v837
  %963 = vmatprep.subr.mxu0 %v832
  %964 = vmatpush1.msra.mxu0 %v831
  %965 = vmatprep.subr.mxu0 %v826
  %966 = vmatpush1.msra.mxu0 %v825
  %967 = vmatprep.subr.mxu0 %v820
  %968 = vmatpush1.msra.mxu0 %v819
  %969 = vmatprep.subr.mxu0 %v814
  %970 = vmatpush1.msra.mxu0 %v813
  %971 = vmatprep.subr.mxu0 0.0
  %972 = vmatpush2.msra.mxu0 0.0
  %973 = vmatprep.subr.mxu0 0.0
  %974 = vmatpush2.msra.mxu0 0.0
  %975 = vmatprep.subr.mxu0 0.0
  %976 = vmatpush2.msra.mxu0 0.0
  %977 = vmatprep.subr.mxu0 0.0
  %978 = vmatpush2.msra.mxu0 0.0
  %979 = vmatprep.subr.mxu0 0.0
  %980 = vmatpush2.msra.mxu0 0.0
  %981 = vmatprep.subr.mxu0 0.0
  %982 = vmatpush2.msra.mxu0 0.0
  %983 = vmatprep.subr.mxu0 0.0
  %984 = vmatpush2.msra.mxu0 0.0
  %985 = vmatprep.subr.mxu0 0.0
  %986 = vmatpush2.msra.mxu0 0.0
  %987 = vmatprep.subr.mxu0 0.0
  %988 = vmatpush2.msra.mxu0 0.0
  %989 = vmatprep.subr.mxu0 0.0
  %990 = vmatpush2.msra.mxu0 0.0
  %991 = vmatprep.subr.mxu0 0.0
  %992 = vmatpush2.msra.mxu0 0.0
  %993 = vmatprep.subr.mxu0 0.0
  %994 = vmatpush2.msra.mxu0 0.0
  %995 = vmatprep.subr.mxu0 0.0
  %996 = vmatpush2.msra.mxu0 0.0
  %997 = vmatprep.subr.mxu0 0.0
  %998 = vmatpush2.msra.mxu0 0.0
  %999 = vmatprep.subr.mxu0 0.0
  %1000 = vmatpush2.msra.mxu0 0.0
  %1001 = vmatprep.subr.mxu0 0.0
  %1002 = vmatpush2.msra.mxu0 0.0
  %1003 = vmatprep.mubr.f32.mxu0 0.0
  %1004 = vmatmul.mubr.f32.gmra.mxu0 %v866
  %v1005 = vpop.f32.mrf.mxu0
  %v1006 = vadd.f32 0.0, %v1005
  %v1007 = vpop.f32.mrf.mxu0
  %v1008 = vadd.f32 0.0, %v1007
  %1009 = vdwg.mxu0
  %1010 = vmatprep.subr.mxu0 0.0
  %1011 = vmatpush1.msra.mxu0 0.0
  %1012 = vmatprep.subr.mxu0 0.0
  %1013 = vmatpush1.msra.mxu0 0.0
  %1014 = vmatprep.subr.mxu0 0.0
  %1015 = vmatpush1.msra.mxu0 0.0
  %1016 = vmatprep.subr.mxu0 0.0
  %1017 = vmatpush1.msra.mxu0 0.0
  %1018 = vmatprep.subr.mxu0 0.0
  %1019 = vmatpush1.msra.mxu0 0.0
  %1020 = vmatprep.subr.mxu0 0.0
  %1021 = vmatpush1.msra.mxu0 0.0
  %1022 = vmatprep.subr.mxu0 0.0
  %1023 = vmatpush1.msra.mxu0 0.0
  %1024 = vmatprep.subr.mxu0 %v864
  %1025 = vmatpush1.msra.mxu0 %v863
  %1026 = vmatprep.subr.mxu0 %v858
  %1027 = vmatpush1.msra.mxu0 %v857
  %1028 = vmatprep.subr.mxu0 %v852
  %1029 = vmatpush1.msra.mxu0 %v851
  %1030 = vmatprep.subr.mxu0 %v846
  %1031 = vmatpush1.msra.mxu0 %v845
  %1032 = vmatprep.subr.mxu0 %v840
  %1033 = vmatpush1.msra.mxu0 %v839
  %1034 = vmatprep.subr.mxu0 %v834
  %1035 = vmatpush1.msra.mxu0 %v833
  %1036 = vmatprep.subr.mxu0 %v828
  %1037 = vmatpush1.msra.mxu0 %v827
  %1038 = vmatprep.subr.mxu0 %v822
  %1039 = vmatpush1.msra.mxu0 %v821
  %1040 = vmatprep.subr.mxu0 %v816
  %1041 = vmatpush1.msra.mxu0 %v815
  %1042 = vmatprep.subr.mxu0 0.0
  %1043 = vmatpush2.msra.mxu0 0.0
  %1044 = vmatprep.subr.mxu0 0.0
  %1045 = vmatpush2.msra.mxu0 0.0
  %1046 = vmatprep.subr.mxu0 0.0
  %1047 = vmatpush2.msra.mxu0 0.0
  %1048 = vmatprep.subr.mxu0 0.0
  %1049 = vmatpush2.msra.mxu0 0.0
  %1050 = vmatprep.subr.mxu0 0.0
  %1051 = vmatpush2.msra.mxu0 0.0
  %1052 = vmatprep.subr.mxu0 0.0
  %1053 = vmatpush2.msra.mxu0 0.0
  %1054 = vmatprep.subr.mxu0 0.0
  %1055 = vmatpush2.msra.mxu0 0.0
  %1056 = vmatprep.subr.mxu0 0.0
  %1057 = vmatpush2.msra.mxu0 0.0
  %1058 = vmatprep.subr.mxu0 0.0
  %1059 = vmatpush2.msra.mxu0 0.0
  %1060 = vmatprep.subr.mxu0 0.0
  %1061 = vmatpush2.msra.mxu0 0.0
  %1062 = vmatprep.subr.mxu0 0.0
  %1063 = vmatpush2.msra.mxu0 0.0
  %1064 = vmatprep.subr.mxu0 0.0
  %1065 = vmatpush2.msra.mxu0 0.0
  %1066 = vmatprep.subr.mxu0 0.0
  %1067 = vmatpush2.msra.mxu0 0.0
  %1068 = vmatprep.subr.mxu0 0.0
  %1069 = vmatpush2.msra.mxu0 0.0
  %1070 = vmatprep.subr.mxu0 0.0
  %1071 = vmatpush2.msra.mxu0 0.0
  %1072 = vmatprep.subr.mxu0 0.0
  %1073 = vmatpush2.msra.mxu0 0.0
  %1074 = vmatprep.mubr.f32.mxu0 0.0
  %1075 = vmatmul.mubr.f32.gmra.mxu0 %v866
  %v1076 = vpop.f32.mrf.mxu0
  %v1077 = vadd.f32 0.0, %v1076
  %v1078 = vpop.f32.mrf.mxu0
  %v1079 = vadd.f32 0.0, %v1078
  %1080 = vdwg.mxu0
  %v1081 = vmul.f32 %v935, %v512
  %v1082 = vmul.f32 %v937, %v516
  %v1083 = vmul.f32 %v1006, %v520
  %v1084 = vmul.f32 %v1008, %v524
  %v1085 = vmul.f32 %v1077, %v528
  %v1086 = vmul.f32 %v1079, %v532
  %v1087 = vadd.f32 %v1081, %v1082
  %v1088 = vadd.f32 %v1087, %v1083
  %v1089 = vadd.f32 %v1088, %v1084
  %v1090 = vadd.f32 %v1089, %v1085
  %v1091 = vadd.f32 %v1090, %v1086
  %1092 = vadd.xlane.f32.xlu0 %v1091
  %v1093 = vpop.xlane.xlu0 %1092
  %v1094 = vmul.f32 %v1081, %v935
  %v1095 = vmul.f32 %v1082, %v937
  %v1096 = vmul.f32 %v1083, %v1006
  %v1097 = vmul.f32 %v1084, %v1008
  %v1098 = vmul.f32 %v1085, %v1077
  %v1099 = vmul.f32 %v1086, %v1079
  %v1100 = vadd.f32 %v1094, %v1095
  %v1101 = vadd.f32 %v1100, %v1096
  %v1102 = vadd.f32 %v1101, %v1097
  %v1103 = vadd.f32 %v1102, %v1098
  %v1104 = vadd.f32 %v1103, %v1099
  %1105 = vadd.xlane.f32.xlu0 %v1104
  %v1106 = vpop.xlane.xlu0 %1105
  %v1107 = vmul.f32 %v1093, 0.001953125
  %v1108 = vmul.f32 %v1106, 0.001953125
  %v1109 = vmul.f32 %v1107, %v1107
  %v1110 = vsub.f32 %v1108, %v1109
  %v1111 = vadd.f32 %v1110, 1e-05
  %v1112 = vrsqrt.pop %v1111
  %v1113 = vmul.f32 %v27, %v1112
  %v1114 = vmul.f32 %v1107, %v1113
  %1116 = vrot.lane.b32.xlu0 %v1114, 1
  %v1117 = vpop.permute.xlu0 %1116
  %v1119 = vsub.f32 %v27, %v1117
  %1121 = vset.pattern.permute.xlu0 2
  %1122 = vperm.xlu0 %1121, %v1113
  %v1123 = vpop.permute.xlu0 %1122
  %v1125 = vmul.f32 %v935, %v1123
  %v1126 = vmul.f32 %v937, %v1123
  %v1127 = vmul.f32 %v1006, %v1123
  %v1128 = vmul.f32 %v1008, %v1123
  %v1129 = vmul.f32 %v1077, %v1123
  %v1130 = vmul.f32 %v1079, %v1123
  %1132 = vset.pattern.permute.xlu0 3
  %1133 = vperm.xlu0 %1132, %v1119
  %v1134 = vpop.permute.xlu0 %1133
  %v1136 = vadd.f32 %v1125, %v1134
  %v1137 = vadd.f32 %v1126, %v1134
  %v1138 = vadd.f32 %v1127, %v1134
  %v1139 = vadd.f32 %v1128, %v1134
  %v1140 = vadd.f32 %v1129, %v1134
  %v1141 = vadd.f32 %v1130, %v1134
  %v1142 = vadd.f32 %v1136, %v20
  %v1143 = vadd.f32 %v1137, %v21
  %v1144 = vadd.f32 %v1138, %v22
  %v1145 = vadd.f32 %v1139, %v23
  %v1146 = vadd.f32 %v1140, %v24
  %v1147 = vadd.f32 %v1141, %v25
  %v1148 = vmax.f32 %v1142, 0.0
  %v1149 = vmax.f32 %v1143, 0.0
  %v1150 = vmax.f32 %v1144, 0.0
  %v1151 = vmax.f32 %v1145, 0.0
  %v1152 = vmax.f32 %v1146, 0.0
  %v1153 = vmax.f32 %v1147, 0.0
  %1154 = vst [vmem:[%s5] sm:$0xff] %v1148
  %1155 = vst [vmem:[%s5 + $0x8] sm:$0xff] %v1149
  %1156 = vst [vmem:[%s5 + $0x10] sm:$0xff] %v1150
  %1157 = vst [vmem:[%s5 + $0x18] sm:$0xff] %v1151
  %1158 = vst [vmem:[%s5 + $0x20] sm:$0xff] %v1152
  %1159 = vst [vmem:[%s5 + $0x28] sm:$0xff] %v1153
  // Predicated region
  $region22: #{residual_block_forward.1} parent=0 // pred_check
    _
  $region23: #{residual_block_forward.1} parent=0 // pred_check_branch
    %1161 = sbr.rel (0) target = $region25
  $region24: #{residual_block_forward.1} parent=0 // pred_region
    _
  $region25: #{residual_block_forward.1} parent=0 // pred_fallthru
    _
  // Predicated region
  $region26: #{residual_block_forward.1} parent=0 // pred_check
    _
  $region27: #{residual_block_forward.1} parent=0 // pred_check_branch
    %1163 = sbr.rel (0) target = $region29
  $region28: #{residual_block_forward.1} parent=0 // pred_region
    _
  $region29: #{residual_block_forward.1} parent=0 // pred_fallthru
    _

</llo_original>
